<compile_context>
chip_gen: v7x
topology: tpu7x:2x2x1
jax: 0.10.0
libtpu: 0.0.40
codegen_flags: <defaults>
</compile_context>

<pallas_src>
import functools

import numpy as np
import jax
import jax.numpy as jnp
from jax.experimental import pallas as pl
from jax.experimental.pallas import tpu as pltpu


# --------------------------------------------------------------------------
# Fused kernel: normalize -> conv3x3 -> ReLU -> avg-pool -> MLP head -> softmax/CE
# --------------------------------------------------------------------------
def _clsnet_kernel(x_ref, shift_ref, mask_ref, w_ref, bconv_ref, pool_ref,
                   w1_ref, b1_ref, w2_ref, b2_ref, lab_ref, cw_ref,
                   probs_ref, loss_ref, *, W):
    """Whole PMTBClsNet eval forward for one batch, feature-major layout.

    x_ref    : (C, N)      raw pixels, N = B*H*W flattened on the lane axis
    shift_ref: (C, 1)      255 * pixel_mean   (scale is folded into w_ref)
    mask_ref : (9, 1, N)   per-tap validity masks == zero "same" padding
    w_ref    : (9, F, C)   bf16 conv weights, tap-major, scaled by 1/(255*std)
    bconv_ref: (F, 1)      conv bias
    pool_ref : (N, B)      per-sample mean-pool matrix (1/(H*W) folded in)
    w1_ref   : (MLP, F), b1_ref: (MLP, 1), w2_ref: (NC, MLP), b2_ref: (NC, 1)
    lab_ref  : (1, B) int32 labels, cw_ref: (NC, 1) CE class weights
    probs_ref: (NC, B) softmax output (transposed), loss_ref: (1, 1)
    """
    N = x_ref.shape[1]
    F = w_ref.shape[1]

    # Mean shift folded into the kernel (VPU; every lane is a real pixel since
    # "same" padding is handled by the per-tap masks, not by a padded copy).
    xs = x_ref[...] - shift_ref[...]                                 # (C, N) f32

    # 3x3 conv as 9 accumulated (F, C) @ (C, N) matmuls over the whole batch.
    # Tap shift == lane roll (XLU); boundary taps are zeroed by the mask.
    acc = jnp.zeros((F, N), jnp.float32)
    for ky in range(3):                                  # static -> fully unrolled
        for kx in range(3):
            t = ky * 3 + kx
            s = (ky - 1) * W + (kx - 1)                  # flattened tap offset
            if s == 0:                                   # center tap: no roll/mask
                xt = xs
            else:
                xt = pltpu.roll(xs, shift=(-s) % N, axis=1)
                xt = xt * mask_ref[t]                    # (1, N) broadcast over C
            acc = acc + jnp.dot(w_ref[t], xt.astype(jnp.bfloat16),
                                preferred_element_type=jnp.float32)

    y = jnp.maximum(acc + bconv_ref[...], 0.0)           # conv bias + ReLU, (F, N)

    # adaptive_avg_pool2d((1,1)) + flatten == one matmul against the pool matrix.
    pooledT = jnp.dot(y, pool_ref[...],
                      preferred_element_type=jnp.float32)            # (F, B)

    # Head on the pooled features (dropout == identity in eval mode).
    h = jnp.dot(w1_ref[...], pooledT,
                preferred_element_type=jnp.float32) + b1_ref[...]    # (MLP, B)
    logitsT = jnp.dot(w2_ref[...], h,
                      preferred_element_type=jnp.float32) + b2_ref[...]  # (NC, B)

    # inference(): numerically stable softmax over classes (exact divide so the
    # returned probabilities sum to 1).
    m = jnp.max(logitsT, axis=0, keepdims=True)                      # (1, B)
    e = jnp.exp(logitsT - m)
    ssum = jnp.sum(e, axis=0, keepdims=True)                         # (1, B)
    probs_ref[...] = e / ssum

    # criterion_2: nn.CrossEntropyLoss(weight=class_weights), mean reduction.
    NC, B = logitsT.shape
    classes = jax.lax.broadcasted_iota(jnp.int32, (NC, B), 0)
    onehot = (classes == lab_ref[...]).astype(jnp.float32)           # (NC, B)
    logp = (logitsT - m) - jnp.log(ssum)                             # log-softmax
    w_ps = jnp.sum(onehot * cw_ref[...], axis=0, keepdims=True)      # (1, B)
    nll = -jnp.sum(onehot * logp, axis=0, keepdims=True)             # (1, B)
    num = jnp.sum(w_ps * nll, axis=1, keepdims=True)                 # (1, 1)
    den = jnp.sum(w_ps, axis=1, keepdims=True)                       # (1, 1)
    loss_ref[...] = num / den


# --------------------------------------------------------------------------
# Wrapper / glue
# --------------------------------------------------------------------------
def pm_tb_clsnet_forward(images_nchw, params, labels):
    x = images_nchw.astype(jnp.float32)
    B, C, H, W = x.shape
    Fb = params["conv_w"].shape[0]          # cfg.MODEL.BCE.INPUTFEATURESIZE
    MLP = params["w1"].shape[0]             # cfg.MODEL.BCE.MLPFEATURESIZE
    NC = params["w2"].shape[0]              # head classes (matches CE weight len)
    HW = H * W
    N = B * HW

    mean = params["pixel_mean"].astype(jnp.float32)                  # (C,)
    std = params["pixel_std"].astype(jnp.float32)                    # (C,)

    # Lane-dense channel-major image layout (pure layout pass; normalization
    # and "same"-padding semantics are handled inside the kernel).
    x_cn = jnp.transpose(x, (1, 0, 2, 3)).reshape(C, N)              # (C, B*H*W)
    shift = (255.0 * mean).reshape(C, 1)

    # Fold the 1/(255*std) normalization scale into the conv weights and lay
    # them out tap-major as bf16 (F, C) MXU LHS tiles.
    w_scaled = params["conv_w"].astype(jnp.float32) / (255.0 * std)[None, :, None, None]
    w_taps = jnp.transpose(w_scaled, (2, 3, 0, 1)).reshape(9, Fb, C).astype(jnp.bfloat16)
    b_conv = params["conv_b"].astype(jnp.float32).reshape(Fb, 1)

    # Compile-time constants: per-tap validity masks (== zero "same" padding)
    # and the per-sample mean-pool matrix with 1/(H*W) folded in.
    p = np.arange(N)
    ii = (p % HW) // W
    jj = p % W
    masks_np = np.ones((9, 1, N), np.float32)
    for ky in range(3):
        for kx in range(3):
            ok = ((ii + ky - 1 >= 0) & (ii + ky - 1 < H) &
                  (jj + kx - 1 >= 0) & (jj + kx - 1 < W))
            masks_np[ky * 3 + kx, 0] = ok.astype(np.float32)
    masks = jnp.asarray(masks_np)
    pool_np = np.zeros((N, B), np.float32)
    pool_np[p, p // HW] = 1.0 / HW
    pool_mat = jnp.asarray(pool_np)

    # Head parameters (PyTorch Linear stores (out, in) == exactly the LHS we
    # need for the transposed-orientation head: no transposes anywhere).
    w1 = params["w1"].astype(jnp.float32)                            # (MLP, F)
    b1 = params["b1"].astype(jnp.float32).reshape(MLP, 1)
    w2 = params["w2"].astype(jnp.float32)                            # (NC, MLP)
    b2 = params["b2"].astype(jnp.float32).reshape(NC, 1)
    lab = labels.astype(jnp.int32).reshape(1, B)
    clsw = params["class_weights"].astype(jnp.float32).reshape(NC, 1)

    def full(shape):
        n = len(shape)
        return pl.BlockSpec(shape, lambda i, n=n: (0,) * n)

    cost = pl.CostEstimate(
        flops=2 * N * 9 * C * Fb + 2 * Fb * N * B + 2 * B * (Fb * MLP + MLP * NC),
        transcendentals=NC * B + B,
        bytes_accessed=4 * (C * N + 9 * N + N * B + Fb + MLP * Fb + NC * MLP
                            + NC * B + 1) + 2 * 9 * Fb * C,
    )

    # Single fused kernel launch for the whole batch.  For large B / images
    # one would grid over batch blocks (TB samples per step) carrying the
    # pooled features in a VMEM scratch and running the head under
    # @pl.when(last step); at these shapes one step minimizes fixed overhead.
    probsT, loss = pl.pallas_call(
        functools.partial(_clsnet_kernel, W=W),
        grid=(1,),
        in_specs=[full(x_cn.shape), full(shift.shape), full(masks.shape),
                  full(w_taps.shape), full(b_conv.shape), full(pool_mat.shape),
                  full(w1.shape), full(b1.shape), full(w2.shape), full(b2.shape),
                  full(lab.shape), full(clsw.shape)],
        out_specs=(full((NC, B)), full((1, 1))),
        out_shape=(jax.ShapeDtypeStruct((NC, B), jnp.float32),
                   jax.ShapeDtypeStruct((1, 1), jnp.float32)),
        compiler_params=pltpu.CompilerParams(
            dimension_semantics=("arbitrary",),
            vmem_limit_bytes=16 * 1024 * 1024,    # actual need is <2 MiB; safe on v5e/v6e/v7x
        ),
        cost_estimate=cost,
    )(x_cn, shift, masks, w_taps, b_conv, pool_mat, w1, b1, w2, b2, lab, clsw)

    return probsT.T, loss[0, 0]


# --------------------------------------------------------------------------
# Main
# --------------------------------------------------------------------------
if __name__ == "__main__":
    key = jax.random.PRNGKey(0)
    k_img, k_conv, k_w1, k_w2 = jax.random.split(key, 4)

    # Small synthetic shapes consistent with the module:
    B, C, H, W = 2, 3, 16, 16          # images: NCHW, values in [0, 255]
    Fb = 32                            # cfg.MODEL.BCE.INPUTFEATURESIZE
    MLP = 32                           # cfg.MODEL.BCE.MLPFEATURESIZE
    NC = 3                             # head classes (CE weight has 3 entries)

    images = jax.random.uniform(k_img, (B, C, H, W), jnp.float32, 0.0, 255.0)
    params = dict(
        pixel_mean=jnp.array([0.485, 0.456, 0.406], jnp.float32),
        pixel_std=jnp.array([0.229, 0.224, 0.225], jnp.float32),
        conv_w=jax.random.normal(k_conv, (Fb, C, 3, 3), jnp.float32) * 0.05,
        conv_b=jnp.zeros((Fb,), jnp.float32),
        w1=jax.random.normal(k_w1, (MLP, Fb), jnp.float32) * 0.01,   # nn.init.normal_(std=0.01)
        b1=jnp.zeros((MLP,), jnp.float32),
        w2=jax.random.normal(k_w2, (NC, MLP), jnp.float32) * 0.01,   # nn.init.normal_(std=0.01)
        b2=jnp.zeros((NC,), jnp.float32),
        class_weights=jnp.array([0.25, 0.25, 0.5], jnp.float32),     # criterion_2 weight
    )
    # gt label mapping ([1,0]->0, [0,1]->1, else 2) is host-side in the module.
    labels = jnp.array([0, 1], jnp.int32)

    fwd = jax.jit(pm_tb_clsnet_forward)
    probs, loss = fwd(images, params, labels)
    jax.block_until_ready((probs, loss))
    print("KERNEL_OK")
</pallas_src>

<mosaic_0001>
module attributes {stable_mosaic.version = 11 : i64} {
  func.func @_clsnet_kernel(%arg0: i32, %arg1: memref<3x512xf32, #tpu.memory_space<vmem>>, %arg2: memref<3x1xf32, #tpu.memory_space<vmem>>, %arg3: memref<9x1x512xf32, #tpu.memory_space<vmem>>, %arg4: memref<9x32x3xbf16, #tpu.memory_space<vmem>>, %arg5: memref<32x1xf32, #tpu.memory_space<vmem>>, %arg6: memref<512x2xf32, #tpu.memory_space<vmem>>, %arg7: memref<32x32xf32, #tpu.memory_space<vmem>>, %arg8: memref<32x1xf32, #tpu.memory_space<vmem>>, %arg9: memref<3x32xf32, #tpu.memory_space<vmem>>, %arg10: memref<3x1xf32, #tpu.memory_space<vmem>>, %arg11: memref<1x2xi32, #tpu.memory_space<vmem>>, %arg12: memref<3x1xf32, #tpu.memory_space<vmem>>, %arg13: memref<3x2xf32, #tpu.memory_space<vmem>>, %arg14: memref<1x1xf32, #tpu.memory_space<vmem>>) attributes {dimension_semantics = [#tpu.dimension_semantics<arbitrary>], iteration_bounds = array<i64: 1>, scalar_prefetch = 0 : i64, scratch_operands = 0 : i64, tpu.core_type = #tpu.core_type<tc>, window_params = [{pipeline_mode = #tpu.pipeline_mode<synchronous>, transform_indices = @transform_0, window_bounds = array<i64: 3, 512>}, {pipeline_mode = #tpu.pipeline_mode<synchronous>, transform_indices = @transform_1, window_bounds = array<i64: 3, 1>}, {pipeline_mode = #tpu.pipeline_mode<synchronous>, transform_indices = @transform_2, window_bounds = array<i64: 9, 1, 512>}, {pipeline_mode = #tpu.pipeline_mode<synchronous>, transform_indices = @transform_3, window_bounds = array<i64: 9, 32, 3>}, {pipeline_mode = #tpu.pipeline_mode<synchronous>, transform_indices = @transform_4, window_bounds = array<i64: 32, 1>}, {pipeline_mode = #tpu.pipeline_mode<synchronous>, transform_indices = @transform_5, window_bounds = array<i64: 512, 2>}, {pipeline_mode = #tpu.pipeline_mode<synchronous>, transform_indices = @transform_6, window_bounds = array<i64: 32, 32>}, {pipeline_mode = #tpu.pipeline_mode<synchronous>, transform_indices = @transform_7, window_bounds = array<i64: 32, 1>}, {pipeline_mode = #tpu.pipeline_mode<synchronous>, transform_indices = @transform_8, window_bounds = array<i64: 3, 32>}, {pipeline_mode = #tpu.pipeline_mode<synchronous>, transform_indices = @transform_9, window_bounds = array<i64: 3, 1>}, {pipeline_mode = #tpu.pipeline_mode<synchronous>, transform_indices = @transform_10, window_bounds = array<i64: 1, 2>}, {pipeline_mode = #tpu.pipeline_mode<synchronous>, transform_indices = @transform_11, window_bounds = array<i64: 3, 1>}, {pipeline_mode = #tpu.pipeline_mode<synchronous>, transform_indices = @transform_12, window_bounds = array<i64: 3, 2>}, {pipeline_mode = #tpu.pipeline_mode<synchronous>, transform_indices = @transform_13, window_bounds = array<i64: 1, 1>}]} {
    %c0 = arith.constant 0 : index
    %c0_0 = arith.constant 0 : index
    %0 = vector.load %arg1[%c0, %c0_0] : memref<3x512xf32, #tpu.memory_space<vmem>>, vector<3x512xf32>
    %c0_1 = arith.constant 0 : index
    %c0_2 = arith.constant 0 : index
    %1 = vector.load %arg2[%c0_1, %c0_2] : memref<3x1xf32, #tpu.memory_space<vmem>>, vector<3x1xf32>
    %2 = vector.broadcast %1 : vector<3x1xf32> to vector<3x512xf32>
    %3 = arith.subf %0, %2 : vector<3x512xf32>
    %cst = arith.constant 0.000000e+00 : f32
    %4 = vector.broadcast %cst : f32 to vector<32x512xf32>
    %c17_i32 = arith.constant 17 : i32
    %5 = tpu.dynamic_rotate %3 by %c17_i32 dim 1 : vector<3x512xf32>, i32 -> vector<3x512xf32>
    %c0_3 = arith.constant 0 : index
    %c0_4 = arith.constant 0 : index
    %c0_5 = arith.constant 0 : index
    %6 = vector.load %arg3[%c0_3, %c0_4, %c0_5] : memref<9x1x512xf32, #tpu.memory_space<vmem>>, vector<1x1x512xf32>
    %7 = vector.shape_cast %6 : vector<1x1x512xf32> to vector<1x512xf32>
    %8 = vector.broadcast %7 : vector<1x512xf32> to vector<3x512xf32>
    %9 = arith.mulf %5, %8 : vector<3x512xf32>
    %c0_6 = arith.constant 0 : index
    %c0_7 = arith.constant 0 : index
    %c0_8 = arith.constant 0 : index
    %10 = vector.load %arg4[%c0_6, %c0_7, %c0_8] : memref<9x32x3xbf16, #tpu.memory_space<vmem>>, vector<1x32x3xbf16>
    %11 = vector.shape_cast %10 : vector<1x32x3xbf16> to vector<32x3xbf16>
    %12 = arith.truncf %9 : vector<3x512xf32> to vector<3x512xbf16>
    %cst_9 = arith.constant dense<0.000000e+00> : vector<32x512xf32>
    %13 = tpu.matmul %11, %12, %cst_9 {dimension_numbers = #tpu.dot_dimension_numbers<[1], [0], [0], [1], [0, 0, 1, 1], [], []>} : vector<32x3xbf16>, vector<3x512xbf16>, vector<32x512xf32> -> vector<32x512xf32>
    %14 = arith.addf %4, %13 : vector<32x512xf32>
    %c16_i32 = arith.constant 16 : i32
    %15 = tpu.dynamic_rotate %3 by %c16_i32 dim 1 : vector<3x512xf32>, i32 -> vector<3x512xf32>
    %c1 = arith.constant 1 : index
    %c0_10 = arith.constant 0 : index
    %c0_11 = arith.constant 0 : index
    %16 = vector.load %arg3[%c1, %c0_10, %c0_11] : memref<9x1x512xf32, #tpu.memory_space<vmem>>, vector<1x1x512xf32>
    %17 = vector.shape_cast %16 : vector<1x1x512xf32> to vector<1x512xf32>
    %18 = vector.broadcast %17 : vector<1x512xf32> to vector<3x512xf32>
    %19 = arith.mulf %15, %18 : vector<3x512xf32>
    %c1_12 = arith.constant 1 : index
    %c0_13 = arith.constant 0 : index
    %c0_14 = arith.constant 0 : index
    %20 = vector.load %arg4[%c1_12, %c0_13, %c0_14] : memref<9x32x3xbf16, #tpu.memory_space<vmem>>, vector<1x32x3xbf16>
    %21 = vector.shape_cast %20 : vector<1x32x3xbf16> to vector<32x3xbf16>
    %22 = arith.truncf %19 : vector<3x512xf32> to vector<3x512xbf16>
    %cst_15 = arith.constant dense<0.000000e+00> : vector<32x512xf32>
    %23 = tpu.matmul %21, %22, %cst_15 {dimension_numbers = #tpu.dot_dimension_numbers<[1], [0], [0], [1], [0, 0, 1, 1], [], []>} : vector<32x3xbf16>, vector<3x512xbf16>, vector<32x512xf32> -> vector<32x512xf32>
    %24 = arith.addf %14, %23 : vector<32x512xf32>
    %c15_i32 = arith.constant 15 : i32
    %25 = tpu.dynamic_rotate %3 by %c15_i32 dim 1 : vector<3x512xf32>, i32 -> vector<3x512xf32>
    %c2 = arith.constant 2 : index
    %c0_16 = arith.constant 0 : index
    %c0_17 = arith.constant 0 : index
    %26 = vector.load %arg3[%c2, %c0_16, %c0_17] : memref<9x1x512xf32, #tpu.memory_space<vmem>>, vector<1x1x512xf32>
    %27 = vector.shape_cast %26 : vector<1x1x512xf32> to vector<1x512xf32>
    %28 = vector.broadcast %27 : vector<1x512xf32> to vector<3x512xf32>
    %29 = arith.mulf %25, %28 : vector<3x512xf32>
    %c2_18 = arith.constant 2 : index
    %c0_19 = arith.constant 0 : index
    %c0_20 = arith.constant 0 : index
    %30 = vector.load %arg4[%c2_18, %c0_19, %c0_20] : memref<9x32x3xbf16, #tpu.memory_space<vmem>>, vector<1x32x3xbf16>
    %31 = vector.shape_cast %30 : vector<1x32x3xbf16> to vector<32x3xbf16>
    %32 = arith.truncf %29 : vector<3x512xf32> to vector<3x512xbf16>
    %cst_21 = arith.constant dense<0.000000e+00> : vector<32x512xf32>
    %33 = tpu.matmul %31, %32, %cst_21 {dimension_numbers = #tpu.dot_dimension_numbers<[1], [0], [0], [1], [0, 0, 1, 1], [], []>} : vector<32x3xbf16>, vector<3x512xbf16>, vector<32x512xf32> -> vector<32x512xf32>
    %34 = arith.addf %24, %33 : vector<32x512xf32>
    %c1_i32 = arith.constant 1 : i32
    %35 = tpu.dynamic_rotate %3 by %c1_i32 dim 1 : vector<3x512xf32>, i32 -> vector<3x512xf32>
    %c3 = arith.constant 3 : index
    %c0_22 = arith.constant 0 : index
    %c0_23 = arith.constant 0 : index
    %36 = vector.load %arg3[%c3, %c0_22, %c0_23] : memref<9x1x512xf32, #tpu.memory_space<vmem>>, vector<1x1x512xf32>
    %37 = vector.shape_cast %36 : vector<1x1x512xf32> to vector<1x512xf32>
    %38 = vector.broadcast %37 : vector<1x512xf32> to vector<3x512xf32>
    %39 = arith.mulf %35, %38 : vector<3x512xf32>
    %c3_24 = arith.constant 3 : index
    %c0_25 = arith.constant 0 : index
    %c0_26 = arith.constant 0 : index
    %40 = vector.load %arg4[%c3_24, %c0_25, %c0_26] : memref<9x32x3xbf16, #tpu.memory_space<vmem>>, vector<1x32x3xbf16>
    %41 = vector.shape_cast %40 : vector<1x32x3xbf16> to vector<32x3xbf16>
    %42 = arith.truncf %39 : vector<3x512xf32> to vector<3x512xbf16>
    %cst_27 = arith.constant dense<0.000000e+00> : vector<32x512xf32>
    %43 = tpu.matmul %41, %42, %cst_27 {dimension_numbers = #tpu.dot_dimension_numbers<[1], [0], [0], [1], [0, 0, 1, 1], [], []>} : vector<32x3xbf16>, vector<3x512xbf16>, vector<32x512xf32> -> vector<32x512xf32>
    %44 = arith.addf %34, %43 : vector<32x512xf32>
    %c4 = arith.constant 4 : index
    %c0_28 = arith.constant 0 : index
    %c0_29 = arith.constant 0 : index
    %45 = vector.load %arg4[%c4, %c0_28, %c0_29] : memref<9x32x3xbf16, #tpu.memory_space<vmem>>, vector<1x32x3xbf16>
    %46 = vector.shape_cast %45 : vector<1x32x3xbf16> to vector<32x3xbf16>
    %47 = arith.truncf %3 : vector<3x512xf32> to vector<3x512xbf16>
    %cst_30 = arith.constant dense<0.000000e+00> : vector<32x512xf32>
    %48 = tpu.matmul %46, %47, %cst_30 {dimension_numbers = #tpu.dot_dimension_numbers<[1], [0], [0], [1], [0, 0, 1, 1], [], []>} : vector<32x3xbf16>, vector<3x512xbf16>, vector<32x512xf32> -> vector<32x512xf32>
    %49 = arith.addf %44, %48 : vector<32x512xf32>
    %c511_i32 = arith.constant 511 : i32
    %50 = tpu.dynamic_rotate %3 by %c511_i32 dim 1 : vector<3x512xf32>, i32 -> vector<3x512xf32>
    %c5 = arith.constant 5 : index
    %c0_31 = arith.constant 0 : index
    %c0_32 = arith.constant 0 : index
    %51 = vector.load %arg3[%c5, %c0_31, %c0_32] : memref<9x1x512xf32, #tpu.memory_space<vmem>>, vector<1x1x512xf32>
    %52 = vector.shape_cast %51 : vector<1x1x512xf32> to vector<1x512xf32>
    %53 = vector.broadcast %52 : vector<1x512xf32> to vector<3x512xf32>
    %54 = arith.mulf %50, %53 : vector<3x512xf32>
    %c5_33 = arith.constant 5 : index
    %c0_34 = arith.constant 0 : index
    %c0_35 = arith.constant 0 : index
    %55 = vector.load %arg4[%c5_33, %c0_34, %c0_35] : memref<9x32x3xbf16, #tpu.memory_space<vmem>>, vector<1x32x3xbf16>
    %56 = vector.shape_cast %55 : vector<1x32x3xbf16> to vector<32x3xbf16>
    %57 = arith.truncf %54 : vector<3x512xf32> to vector<3x512xbf16>
    %cst_36 = arith.constant dense<0.000000e+00> : vector<32x512xf32>
    %58 = tpu.matmul %56, %57, %cst_36 {dimension_numbers = #tpu.dot_dimension_numbers<[1], [0], [0], [1], [0, 0, 1, 1], [], []>} : vector<32x3xbf16>, vector<3x512xbf16>, vector<32x512xf32> -> vector<32x512xf32>
    %59 = arith.addf %49, %58 : vector<32x512xf32>
    %c497_i32 = arith.constant 497 : i32
    %60 = tpu.dynamic_rotate %3 by %c497_i32 dim 1 : vector<3x512xf32>, i32 -> vector<3x512xf32>
    %c6 = arith.constant 6 : index
    %c0_37 = arith.constant 0 : index
    %c0_38 = arith.constant 0 : index
    %61 = vector.load %arg3[%c6, %c0_37, %c0_38] : memref<9x1x512xf32, #tpu.memory_space<vmem>>, vector<1x1x512xf32>
    %62 = vector.shape_cast %61 : vector<1x1x512xf32> to vector<1x512xf32>
    %63 = vector.broadcast %62 : vector<1x512xf32> to vector<3x512xf32>
    %64 = arith.mulf %60, %63 : vector<3x512xf32>
    %c6_39 = arith.constant 6 : index
    %c0_40 = arith.constant 0 : index
    %c0_41 = arith.constant 0 : index
    %65 = vector.load %arg4[%c6_39, %c0_40, %c0_41] : memref<9x32x3xbf16, #tpu.memory_space<vmem>>, vector<1x32x3xbf16>
    %66 = vector.shape_cast %65 : vector<1x32x3xbf16> to vector<32x3xbf16>
    %67 = arith.truncf %64 : vector<3x512xf32> to vector<3x512xbf16>
    %cst_42 = arith.constant dense<0.000000e+00> : vector<32x512xf32>
    %68 = tpu.matmul %66, %67, %cst_42 {dimension_numbers = #tpu.dot_dimension_numbers<[1], [0], [0], [1], [0, 0, 1, 1], [], []>} : vector<32x3xbf16>, vector<3x512xbf16>, vector<32x512xf32> -> vector<32x512xf32>
    %69 = arith.addf %59, %68 : vector<32x512xf32>
    %c496_i32 = arith.constant 496 : i32
    %70 = tpu.dynamic_rotate %3 by %c496_i32 dim 1 : vector<3x512xf32>, i32 -> vector<3x512xf32>
    %c7 = arith.constant 7 : index
    %c0_43 = arith.constant 0 : index
    %c0_44 = arith.constant 0 : index
    %71 = vector.load %arg3[%c7, %c0_43, %c0_44] : memref<9x1x512xf32, #tpu.memory_space<vmem>>, vector<1x1x512xf32>
    %72 = vector.shape_cast %71 : vector<1x1x512xf32> to vector<1x512xf32>
    %73 = vector.broadcast %72 : vector<1x512xf32> to vector<3x512xf32>
    %74 = arith.mulf %70, %73 : vector<3x512xf32>
    %c7_45 = arith.constant 7 : index
    %c0_46 = arith.constant 0 : index
    %c0_47 = arith.constant 0 : index
    %75 = vector.load %arg4[%c7_45, %c0_46, %c0_47] : memref<9x32x3xbf16, #tpu.memory_space<vmem>>, vector<1x32x3xbf16>
    %76 = vector.shape_cast %75 : vector<1x32x3xbf16> to vector<32x3xbf16>
    %77 = arith.truncf %74 : vector<3x512xf32> to vector<3x512xbf16>
    %cst_48 = arith.constant dense<0.000000e+00> : vector<32x512xf32>
    %78 = tpu.matmul %76, %77, %cst_48 {dimension_numbers = #tpu.dot_dimension_numbers<[1], [0], [0], [1], [0, 0, 1, 1], [], []>} : vector<32x3xbf16>, vector<3x512xbf16>, vector<32x512xf32> -> vector<32x512xf32>
    %79 = arith.addf %69, %78 : vector<32x512xf32>
    %c495_i32 = arith.constant 495 : i32
    %80 = tpu.dynamic_rotate %3 by %c495_i32 dim 1 : vector<3x512xf32>, i32 -> vector<3x512xf32>
    %c8 = arith.constant 8 : index
    %c0_49 = arith.constant 0 : index
    %c0_50 = arith.constant 0 : index
    %81 = vector.load %arg3[%c8, %c0_49, %c0_50] : memref<9x1x512xf32, #tpu.memory_space<vmem>>, vector<1x1x512xf32>
    %82 = vector.shape_cast %81 : vector<1x1x512xf32> to vector<1x512xf32>
    %83 = vector.broadcast %82 : vector<1x512xf32> to vector<3x512xf32>
    %84 = arith.mulf %80, %83 : vector<3x512xf32>
    %c8_51 = arith.constant 8 : index
    %c0_52 = arith.constant 0 : index
    %c0_53 = arith.constant 0 : index
    %85 = vector.load %arg4[%c8_51, %c0_52, %c0_53] : memref<9x32x3xbf16, #tpu.memory_space<vmem>>, vector<1x32x3xbf16>
    %86 = vector.shape_cast %85 : vector<1x32x3xbf16> to vector<32x3xbf16>
    %87 = arith.truncf %84 : vector<3x512xf32> to vector<3x512xbf16>
    %cst_54 = arith.constant dense<0.000000e+00> : vector<32x512xf32>
    %88 = tpu.matmul %86, %87, %cst_54 {dimension_numbers = #tpu.dot_dimension_numbers<[1], [0], [0], [1], [0, 0, 1, 1], [], []>} : vector<32x3xbf16>, vector<3x512xbf16>, vector<32x512xf32> -> vector<32x512xf32>
    %89 = arith.addf %79, %88 : vector<32x512xf32>
    %c0_55 = arith.constant 0 : index
    %c0_56 = arith.constant 0 : index
    %90 = vector.load %arg5[%c0_55, %c0_56] : memref<32x1xf32, #tpu.memory_space<vmem>>, vector<32x1xf32>
    %91 = vector.broadcast %90 : vector<32x1xf32> to vector<32x512xf32>
    %92 = arith.addf %89, %91 : vector<32x512xf32>
    %cst_57 = arith.constant 0.000000e+00 : f32
    %93 = vector.broadcast %cst_57 : f32 to vector<32x512xf32>
    %94 = arith.maximumf %92, %93 : vector<32x512xf32>
    %c0_58 = arith.constant 0 : index
    %c0_59 = arith.constant 0 : index
    %95 = vector.load %arg6[%c0_58, %c0_59] : memref<512x2xf32, #tpu.memory_space<vmem>>, vector<512x2xf32>
    %cst_60 = arith.constant dense<0.000000e+00> : vector<32x2xf32>
    %96 = tpu.matmul %94, %95, %cst_60 {dimension_numbers = #tpu.dot_dimension_numbers<[1], [0], [0], [1], [0, 0, 1, 1], [], []>} : vector<32x512xf32>, vector<512x2xf32>, vector<32x2xf32> -> vector<32x2xf32>
    %c0_61 = arith.constant 0 : index
    %c0_62 = arith.constant 0 : index
    %97 = vector.load %arg7[%c0_61, %c0_62] : memref<32x32xf32, #tpu.memory_space<vmem>>, vector<32x32xf32>
    %cst_63 = arith.constant dense<0.000000e+00> : vector<32x2xf32>
    %98 = tpu.matmul %97, %96, %cst_63 {dimension_numbers = #tpu.dot_dimension_numbers<[1], [0], [0], [1], [0, 0, 1, 1], [], []>} : vector<32x32xf32>, vector<32x2xf32>, vector<32x2xf32> -> vector<32x2xf32>
    %c0_64 = arith.constant 0 : index
    %c0_65 = arith.constant 0 : index
    %99 = vector.load %arg8[%c0_64, %c0_65] : memref<32x1xf32, #tpu.memory_space<vmem>>, vector<32x1xf32>
    %100 = vector.broadcast %99 : vector<32x1xf32> to vector<32x2xf32>
    %101 = arith.addf %98, %100 : vector<32x2xf32>
    %c0_66 = arith.constant 0 : index
    %c0_67 = arith.constant 0 : index
    %102 = vector.load %arg9[%c0_66, %c0_67] : memref<3x32xf32, #tpu.memory_space<vmem>>, vector<3x32xf32>
    %cst_68 = arith.constant dense<0.000000e+00> : vector<3x2xf32>
    %103 = tpu.matmul %102, %101, %cst_68 {dimension_numbers = #tpu.dot_dimension_numbers<[1], [0], [0], [1], [0, 0, 1, 1], [], []>} : vector<3x32xf32>, vector<32x2xf32>, vector<3x2xf32> -> vector<3x2xf32>
    %c0_69 = arith.constant 0 : index
    %c0_70 = arith.constant 0 : index
    %104 = vector.load %arg10[%c0_69, %c0_70] : memref<3x1xf32, #tpu.memory_space<vmem>>, vector<3x1xf32>
    %105 = vector.broadcast %104 : vector<3x1xf32> to vector<3x2xf32>
    %106 = arith.addf %103, %105 : vector<3x2xf32>
    %cst_71 = arith.constant dense<0xFF800000> : vector<2xf32>
    %107 = vector.multi_reduction <maximumf>, %106, %cst_71 [0] : vector<3x2xf32> to vector<2xf32>
    %108 = vector.shape_cast %107 : vector<2xf32> to vector<1x2xf32>
    %109 = vector.broadcast %108 : vector<1x2xf32> to vector<3x2xf32>
    %110 = arith.subf %106, %109 : vector<3x2xf32>
    %111 = math.exp %110 : vector<3x2xf32>
    %cst_72 = arith.constant dense<0.000000e+00> : vector<2xf32>
    %112 = vector.multi_reduction <add>, %111, %cst_72 [0] : vector<3x2xf32> to vector<2xf32>
    %113 = vector.shape_cast %112 : vector<2xf32> to vector<1x2xf32>
    %114 = vector.broadcast %113 : vector<1x2xf32> to vector<3x2xf32>
    %115 = arith.divf %111, %114 : vector<3x2xf32>
    %c0_73 = arith.constant 0 : index
    %c0_74 = arith.constant 0 : index
    %116 = vector.load %arg13[%c0_73, %c0_74] : memref<3x2xf32, #tpu.memory_space<vmem>>, vector<3x2xf32>
    tpu.vector_store %arg13[%c0_73, %c0_74], %115 {strides = array<i32>} : memref<3x2xf32, #tpu.memory_space<vmem>>, vector<3x2xf32>,
    %117 = tpu.iota {dimensions = array<i32: 0>} : vector<3x2xi32>
    %c0_75 = arith.constant 0 : index
    %c0_76 = arith.constant 0 : index
    %118 = vector.load %arg11[%c0_75, %c0_76] : memref<1x2xi32, #tpu.memory_space<vmem>>, vector<1x2xi32>
    %119 = vector.broadcast %118 : vector<1x2xi32> to vector<3x2xi32>
    %120 = arith.cmpi eq, %117, %119 : vector<3x2xi32>
    %121 = arith.extui %120 : vector<3x2xi1> to vector<3x2xi32>
    %122 = arith.sitofp %121 : vector<3x2xi32> to vector<3x2xf32>
    %123 = vector.broadcast %108 : vector<1x2xf32> to vector<3x2xf32>
    %124 = arith.subf %106, %123 : vector<3x2xf32>
    %125 = math.log %113 : vector<1x2xf32>
    %126 = vector.broadcast %125 : vector<1x2xf32> to vector<3x2xf32>
    %127 = arith.subf %124, %126 : vector<3x2xf32>
    %c0_77 = arith.constant 0 : index
    %c0_78 = arith.constant 0 : index
    %128 = vector.load %arg12[%c0_77, %c0_78] : memref<3x1xf32, #tpu.memory_space<vmem>>, vector<3x1xf32>
    %129 = vector.broadcast %128 : vector<3x1xf32> to vector<3x2xf32>
    %130 = arith.mulf %122, %129 : vector<3x2xf32>
    %cst_79 = arith.constant dense<0.000000e+00> : vector<2xf32>
    %131 = vector.multi_reduction <add>, %130, %cst_79 [0] : vector<3x2xf32> to vector<2xf32>
    %132 = vector.shape_cast %131 : vector<2xf32> to vector<1x2xf32>
    %133 = arith.mulf %122, %127 : vector<3x2xf32>
    %cst_80 = arith.constant dense<0.000000e+00> : vector<2xf32>
    %134 = vector.multi_reduction <add>, %133, %cst_80 [0] : vector<3x2xf32> to vector<2xf32>
    %135 = vector.shape_cast %134 : vector<2xf32> to vector<1x2xf32>
    %cst_81 = arith.constant 0.000000e+00 : f32
    %136 = vector.broadcast %cst_81 : f32 to vector<1x2xf32>
    %137 = arith.subf %136, %135 : vector<1x2xf32>
    %138 = arith.mulf %132, %137 : vector<1x2xf32>
    %cst_82 = arith.constant dense<0.000000e+00> : vector<1xf32>
    %139 = vector.multi_reduction <add>, %138, %cst_82 [1] : vector<1x2xf32> to vector<1xf32>
    %140 = vector.shape_cast %139 : vector<1xf32> to vector<1x1xf32>
    %cst_83 = arith.constant dense<0.000000e+00> : vector<1xf32>
    %141 = vector.multi_reduction <add>, %132, %cst_83 [1] : vector<1x2xf32> to vector<1xf32>
    %142 = vector.shape_cast %141 : vector<1xf32> to vector<1x1xf32>
    %143 = arith.divf %140, %142 : vector<1x1xf32>
    %c0_84 = arith.constant 0 : index
    %c0_85 = arith.constant 0 : index
    %144 = vector.load %arg14[%c0_84, %c0_85] : memref<1x1xf32, #tpu.memory_space<vmem>>, vector<1x1xf32>
    tpu.vector_store %arg14[%c0_84, %c0_85], %143 {strides = array<i32>} : memref<1x1xf32, #tpu.memory_space<vmem>>, vector<1x1xf32>,
    return
  }
  func.func @transform_0(%arg0: i32) -> (i32, i32) {
    %c0_i32 = arith.constant 0 : i32
    %c0_i32_0 = arith.constant 0 : i32
    %c0_i32_1 = arith.constant 0 : i32
    return %c0_i32, %c0_i32_0 : i32, i32
  }
  func.func @transform_1(%arg0: i32) -> (i32, i32) {
    %c0_i32 = arith.constant 0 : i32
    %c0_i32_0 = arith.constant 0 : i32
    %c0_i32_1 = arith.constant 0 : i32
    return %c0_i32, %c0_i32_0 : i32, i32
  }
  func.func @transform_2(%arg0: i32) -> (i32, i32, i32) {
    %c0_i32 = arith.constant 0 : i32
    %c0_i32_0 = arith.constant 0 : i32
    %c0_i32_1 = arith.constant 0 : i32
    %c0_i32_2 = arith.constant 0 : i32
    return %c0_i32, %c0_i32_0, %c0_i32_1 : i32, i32, i32
  }
  func.func @transform_3(%arg0: i32) -> (i32, i32, i32) {
    %c0_i32 = arith.constant 0 : i32
    %c0_i32_0 = arith.constant 0 : i32
    %c0_i32_1 = arith.constant 0 : i32
    %c0_i32_2 = arith.constant 0 : i32
    return %c0_i32, %c0_i32_0, %c0_i32_1 : i32, i32, i32
  }
  func.func @transform_4(%arg0: i32) -> (i32, i32) {
    %c0_i32 = arith.constant 0 : i32
    %c0_i32_0 = arith.constant 0 : i32
    %c0_i32_1 = arith.constant 0 : i32
    return %c0_i32, %c0_i32_0 : i32, i32
  }
  func.func @transform_5(%arg0: i32) -> (i32, i32) {
    %c0_i32 = arith.constant 0 : i32
    %c0_i32_0 = arith.constant 0 : i32
    %c0_i32_1 = arith.constant 0 : i32
    return %c0_i32, %c0_i32_0 : i32, i32
  }
  func.func @transform_6(%arg0: i32) -> (i32, i32) {
    %c0_i32 = arith.constant 0 : i32
    %c0_i32_0 = arith.constant 0 : i32
    %c0_i32_1 = arith.constant 0 : i32
    return %c0_i32, %c0_i32_0 : i32, i32
  }
  func.func @transform_7(%arg0: i32) -> (i32, i32) {
    %c0_i32 = arith.constant 0 : i32
    %c0_i32_0 = arith.constant 0 : i32
    %c0_i32_1 = arith.constant 0 : i32
    return %c0_i32, %c0_i32_0 : i32, i32
  }
  func.func @transform_8(%arg0: i32) -> (i32, i32) {
    %c0_i32 = arith.constant 0 : i32
    %c0_i32_0 = arith.constant 0 : i32
    %c0_i32_1 = arith.constant 0 : i32
    return %c0_i32, %c0_i32_0 : i32, i32
  }
  func.func @transform_9(%arg0: i32) -> (i32, i32) {
    %c0_i32 = arith.constant 0 : i32
    %c0_i32_0 = arith.constant 0 : i32
    %c0_i32_1 = arith.constant 0 : i32
    return %c0_i32, %c0_i32_0 : i32, i32
  }
  func.func @transform_10(%arg0: i32) -> (i32, i32) {
    %c0_i32 = arith.constant 0 : i32
    %c0_i32_0 = arith.constant 0 : i32
    %c0_i32_1 = arith.constant 0 : i32
    return %c0_i32, %c0_i32_0 : i32, i32
  }
  func.func @transform_11(%arg0: i32) -> (i32, i32) {
    %c0_i32 = arith.constant 0 : i32
    %c0_i32_0 = arith.constant 0 : i32
    %c0_i32_1 = arith.constant 0 : i32
    return %c0_i32, %c0_i32_0 : i32, i32
  }
  func.func @transform_12(%arg0: i32) -> (i32, i32) {
    %c0_i32 = arith.constant 0 : i32
    %c0_i32_0 = arith.constant 0 : i32
    %c0_i32_1 = arith.constant 0 : i32
    return %c0_i32, %c0_i32_0 : i32, i32
  }
  func.func @transform_13(%arg0: i32) -> (i32, i32) {
    %c0_i32 = arith.constant 0 : i32
    %c0_i32_0 = arith.constant 0 : i32
    %c0_i32_1 = arith.constant 0 : i32
    return %c0_i32, %c0_i32_0 : i32, i32
  }
}

</mosaic_0001>

<llo_original>
// kernel: pm_tb_clsnet_forward.1
$region0: #{pm_tb_clsnet_forward.1}
  #allocation0 [shape = 'u32[]', space=smem, size = 0x4, offset = 0x4, fixed_abs, tag = 'smem constant byte address 0x4 - core index']
  #allocation1 [shape = 'u32[144,128]{1,0:T(1,128)}', space=vmem, size = 0x12000, scoped, tag = 'internal scratch']
  %s0 = inlined_call_operand.vmem [shape: f32[3,512], index: 0, kind: input, shape index: {}]
  %s1 = inlined_call_operand.vmem [shape: f32[3,1], index: 1, kind: input, shape index: {}]
  %s2 = inlined_call_operand.vmem [shape: f32[9,1,512], index: 2, kind: input, shape index: {}]
  %s3 = inlined_call_operand.vmem [shape: bf16[9,32,3], index: 3, kind: input, shape index: {}]
  %s4 = inlined_call_operand.vmem [shape: f32[32,1], index: 4, kind: input, shape index: {}]
  %s5 = inlined_call_operand.vmem [shape: f32[512,2], index: 5, kind: input, shape index: {}]
  %s6 = inlined_call_operand.vmem [shape: f32[32,32], index: 6, kind: input, shape index: {}]
  %s7 = inlined_call_operand.vmem [shape: f32[32,1], index: 7, kind: input, shape index: {}]
  %s8 = inlined_call_operand.vmem [shape: f32[3,32], index: 8, kind: input, shape index: {}]
  %s9 = inlined_call_operand.vmem [shape: f32[3,1], index: 9, kind: input, shape index: {}]
  %s10 = inlined_call_operand.vmem [shape: s32[1,2], index: 10, kind: input, shape index: {}]
  %s11 = inlined_call_operand.vmem [shape: f32[3,1], index: 11, kind: input, shape index: {}]
  %s12 = inlined_call_operand.vmem [shape: f32[3,2], index: 12, kind: output, shape index: {0}]
  %s13 = inlined_call_operand.hbm [shape: f32[1,1], index: 13, kind: output, shape index: {1}]
  %14 = xla_tuple %s12, %s13
  %s15 = sld [smem:[#allocation0]]
  $region66: #{pm_tb_clsnet_forward.1} parent=0
    _
  %s17 = ssub.s32 1, %s15
  %s18 = scalar_select 0, %s17, %s15
  $region1: #{pm_tb_clsnet_forward.1} parent=0
    #allocation2 [shape = 'u8[512]{0}', space=vmem, size = 0x400, scoped, tag = 'output window, operand 1, single buffered']
    #allocation3 [shape = 's32[1]{0}', space=sflag, size = 0x4, scoped, tag = 'scoped memory for pm_tb_clsnet_forward.1']
    %19 = vsyncpa [#allocation3], 0
    // Predicated region
    $region2: #{pm_tb_clsnet_forward.1} parent=1 // pred_check
      _
    $region3: #{pm_tb_clsnet_forward.1} parent=1 // pred_check_branch
      %21 = sbr.rel (0) target = $region5
    $region4: #{pm_tb_clsnet_forward.1} parent=1 // pred_region
      _
    $region5: #{pm_tb_clsnet_forward.1} parent=1 // pred_fallthru
      _
    // Predicated region
    $region6: #{pm_tb_clsnet_forward.1} parent=1 // pred_check
      _
    $region7: #{pm_tb_clsnet_forward.1} parent=1 // pred_check_branch
      %23 = sbr.rel (0) target = $region9
    $region8: #{pm_tb_clsnet_forward.1} parent=1 // pred_region
      _
    $region9: #{pm_tb_clsnet_forward.1} parent=1 // pred_fallthru
      _
    // Predicated region
    $region10: #{pm_tb_clsnet_forward.1} parent=1 // pred_check
      _
    $region11: #{pm_tb_clsnet_forward.1} parent=1 // pred_check_branch
      %25 = sbr.rel (0) target = $region13
    $region12: #{pm_tb_clsnet_forward.1} parent=1 // pred_region
      _
    $region13: #{pm_tb_clsnet_forward.1} parent=1 // pred_fallthru
      _
    // Predicated region
    $region14: #{pm_tb_clsnet_forward.1} parent=1 // pred_check
      _
    $region15: #{pm_tb_clsnet_forward.1} parent=1 // pred_check_branch
      %27 = sbr.rel (0) target = $region17
    $region16: #{pm_tb_clsnet_forward.1} parent=1 // pred_region
      _
    $region17: #{pm_tb_clsnet_forward.1} parent=1 // pred_fallthru
      _
    // Predicated region
    $region18: #{pm_tb_clsnet_forward.1} parent=1 // pred_check
      _
    $region19: #{pm_tb_clsnet_forward.1} parent=1 // pred_check_branch
      %29 = sbr.rel (0) target = $region21
    $region20: #{pm_tb_clsnet_forward.1} parent=1 // pred_region
      _
    $region21: #{pm_tb_clsnet_forward.1} parent=1 // pred_fallthru
      _
    // Predicated region
    $region22: #{pm_tb_clsnet_forward.1} parent=1 // pred_check
      _
    $region23: #{pm_tb_clsnet_forward.1} parent=1 // pred_check_branch
      %31 = sbr.rel (0) target = $region25
    $region24: #{pm_tb_clsnet_forward.1} parent=1 // pred_region
      _
    $region25: #{pm_tb_clsnet_forward.1} parent=1 // pred_fallthru
      _
    // Predicated region
    $region26: #{pm_tb_clsnet_forward.1} parent=1 // pred_check
      _
    $region27: #{pm_tb_clsnet_forward.1} parent=1 // pred_check_branch
      %33 = sbr.rel (0) target = $region29
    $region28: #{pm_tb_clsnet_forward.1} parent=1 // pred_region
      _
    $region29: #{pm_tb_clsnet_forward.1} parent=1 // pred_fallthru
      _
    // Predicated region
    $region30: #{pm_tb_clsnet_forward.1} parent=1 // pred_check
      _
    $region31: #{pm_tb_clsnet_forward.1} parent=1 // pred_check_branch
      %35 = sbr.rel (0) target = $region33
    $region32: #{pm_tb_clsnet_forward.1} parent=1 // pred_region
      _
    $region33: #{pm_tb_clsnet_forward.1} parent=1 // pred_fallthru
      _
    // Predicated region
    $region34: #{pm_tb_clsnet_forward.1} parent=1 // pred_check
      _
    $region35: #{pm_tb_clsnet_forward.1} parent=1 // pred_check_branch
      %37 = sbr.rel (0) target = $region37
    $region36: #{pm_tb_clsnet_forward.1} parent=1 // pred_region
      _
    $region37: #{pm_tb_clsnet_forward.1} parent=1 // pred_fallthru
      _
    // Predicated region
    $region38: #{pm_tb_clsnet_forward.1} parent=1 // pred_check
      _
    $region39: #{pm_tb_clsnet_forward.1} parent=1 // pred_check_branch
      %39 = sbr.rel (0) target = $region41
    $region40: #{pm_tb_clsnet_forward.1} parent=1 // pred_region
      _
    $region41: #{pm_tb_clsnet_forward.1} parent=1 // pred_fallthru
      _
    // Predicated region
    $region42: #{pm_tb_clsnet_forward.1} parent=1 // pred_check
      _
    $region43: #{pm_tb_clsnet_forward.1} parent=1 // pred_check_branch
      %41 = sbr.rel (0) target = $region45
    $region44: #{pm_tb_clsnet_forward.1} parent=1 // pred_region
      _
    $region45: #{pm_tb_clsnet_forward.1} parent=1 // pred_fallthru
      _
    // Predicated region
    $region46: #{pm_tb_clsnet_forward.1} parent=1 // pred_check
      _
    $region47: #{pm_tb_clsnet_forward.1} parent=1 // pred_check_branch
      %43 = sbr.rel (0) target = $region49
    $region48: #{pm_tb_clsnet_forward.1} parent=1 // pred_region
      _
    $region49: #{pm_tb_clsnet_forward.1} parent=1 // pred_fallthru
      _
    %v45 = vld [vmem:[%s0] sm:$0x77]
    %v46 = vld [vmem:[%s0 + $0x8] sm:$0x77]
    %v47 = vld [vmem:[%s1] sm:$0x7]
    %49 = vset.pattern.permute.xlu0 0
    %50 = vperm.xlu0 %49, %v47
    %v51 = vpop.permute.xlu0 %50
    %v53 = vunpack.c.l.s4 839922192
    %v54 = vunpack.c.0.s8 %v53
    %v55 = vlaneseq
    %v56 = vshrl.u32 %v55, 7
    %v57 = vsub.s32 %v54, %v56
    %v58 = vrot.slane %v51, %v57
    %v60 = vsub.f32 %v45, %v58
    %v61 = vsub.f32 %v46, %v58
    %v64 = vcombine.high %v60, %v60
    %v65 = vcombine.high %v61, %v61
    %68 = vrot.lane.b32.xlu0 %v60, 17
    %v69 = vpop.permute.xlu0 %68
    %70 = vrot.lane.b32.xlu0 %v64, 17
    %v71 = vpop.permute.xlu0 %70
    %72 = vrot.lane.b32.xlu0 %v61, 17
    %v73 = vpop.permute.xlu0 %72
    %74 = vrot.lane.b32.xlu0 %v65, 17
    %v75 = vpop.permute.xlu0 %74
    %v76 = vlaneseq
    %v77 = vand.u32 %v76, 127
    %vm78 = vcmp.lt.s32.totalorder %v77, 17
    %v79 = vsel %vm78, %v73, %v75
    %v80 = vsel %vm78, %v71, %v73
    %v81 = vsel %vm78, %v69, %v71
    %v82 = vsel %vm78, %v75, %v69
    %v83 = vld [vmem:[%s2] sm:$0xf]
    %v85 = vlaneseq
    %v86 = vshrl.u32 %v85, 7
    %v87 = vsub.s32 0, %v86
    %v88 = vrot.slane %v83, %v87
    %v89 = vlaneseq
    %v90 = vshrl.u32 %v89, 7
    %v91 = vsub.s32 1, %v90
    %v92 = vrot.slane %v83, %v91
    %v93 = vlaneseq
    %v94 = vshrl.u32 %v93, 7
    %v95 = vsub.s32 2, %v94
    %v96 = vrot.slane %v83, %v95
    %v97 = vlaneseq
    %v98 = vshrl.u32 %v97, 7
    %v99 = vsub.s32 3, %v98
    %v100 = vrot.slane %v83, %v99
    %v105 = vmul.f32 %v82, %v88
    %v106 = vmul.f32 %v81, %v92
    %v107 = vmul.f32 %v80, %v96
    %v108 = vmul.f32 %v79, %v100
    %v109 = vld [vmem:[%s3] sm:$0xf]
    %v110 = vld [vmem:[%s3 + $0x4] sm:$0xf]
    %v111 = vld [vmem:[%s3 + $0x8] sm:$0xf]
    %v112 = vld [vmem:[%s3 + $0xc] sm:$0xf]
    %v113 = vpack.c.bf16 %v105, %v105
    %v114 = vpack.c.bf16 %v106, %v106
    %v115 = vpack.c.bf16 %v107, %v107
    %v116 = vpack.c.bf16 %v108, %v108
    %117 = vrot.lane.b32.xlu0 %v60, 16
    %v118 = vpop.permute.xlu0 %117
    %119 = vrot.lane.b32.xlu0 %v64, 16
    %v120 = vpop.permute.xlu0 %119
    %121 = vrot.lane.b32.xlu0 %v61, 16
    %v122 = vpop.permute.xlu0 %121
    %123 = vrot.lane.b32.xlu0 %v65, 16
    %v124 = vpop.permute.xlu0 %123
    %vm125 = vcmp.lt.s32.totalorder %v77, 16
    %v126 = vsel %vm125, %v122, %v124
    %v127 = vsel %vm125, %v120, %v122
    %v128 = vsel %vm125, %v118, %v120
    %v129 = vsel %vm125, %v124, %v118
    %s130 = scalar_lea.vmem %s2, 4
    %v131 = vld [vmem:[%s130] sm:$0xf]
    %v133 = vlaneseq
    %v134 = vshrl.u32 %v133, 7
    %v135 = vsub.s32 0, %v134
    %v136 = vrot.slane %v131, %v135
    %v137 = vlaneseq
    %v138 = vshrl.u32 %v137, 7
    %v139 = vsub.s32 1, %v138
    %v140 = vrot.slane %v131, %v139
    %v141 = vlaneseq
    %v142 = vshrl.u32 %v141, 7
    %v143 = vsub.s32 2, %v142
    %v144 = vrot.slane %v131, %v143
    %v145 = vlaneseq
    %v146 = vshrl.u32 %v145, 7
    %v147 = vsub.s32 3, %v146
    %v148 = vrot.slane %v131, %v147
    %v153 = vmul.f32 %v129, %v136
    %v154 = vmul.f32 %v128, %v140
    %v155 = vmul.f32 %v127, %v144
    %v156 = vmul.f32 %v126, %v148
    %s157 = scalar_lea.vmem %s3, 16
    %v158 = vld [vmem:[%s157] sm:$0xf]
    %v159 = vld [vmem:[%s157 + $0x4] sm:$0xf]
    %v160 = vld [vmem:[%s157 + $0x8] sm:$0xf]
    %v161 = vld [vmem:[%s157 + $0xc] sm:$0xf]
    %v162 = vpack.c.bf16 %v153, %v153
    %v163 = vpack.c.bf16 %v154, %v154
    %v164 = vpack.c.bf16 %v155, %v155
    %v165 = vpack.c.bf16 %v156, %v156
    %v170 = vunpack.c.l.b16 %v158
    %v171 = vunpack.c.l.b16 %v159
    %v172 = vunpack.c.l.b16 %v160
    %v173 = vunpack.c.l.b16 %v161
    %v174 = vpack.c.b16 %v171, %v170
    %v175 = vpack.c.b16 %v173, %v172
    %vm176 = vcmask 23552
    %v178 = vsel %vm176, %v174, 0
    %v181 = vsel %vm176, %v175, 0
    %vm183 = vcmask 1040384
    %vm184 = vcmask 1041408
    %v185 = vsel %vm183, 4294967295, 65535
    %v186 = vsel %vm184, %v185, 0
    %v188 = vand.u32 %v162, %v186
    %v191 = vand.u32 %v163, %v186
    %v194 = vand.u32 %v164, %v186
    %v197 = vand.u32 %v165, %v186
    %199 = vmatprep.subr.bf16.mxu0 %v191
    %200 = vmatpush1.bf16.msra.mxu0 %v188
    %201 = vmatprep.subr.bf16.mxu0 0
    %202 = vmatpush1.bf16.msra.mxu0 0
    %203 = vmatprep.subr.bf16.mxu0 0
    %204 = vmatpush1.bf16.msra.mxu0 0
    %205 = vmatprep.subr.bf16.mxu0 0
    %206 = vmatpush1.bf16.msra.mxu0 0
    %207 = vmatprep.subr.bf16.mxu0 0
    %208 = vmatpush1.bf16.msra.mxu0 0
    %209 = vmatprep.subr.bf16.mxu0 0
    %210 = vmatpush1.bf16.msra.mxu0 0
    %211 = vmatprep.subr.bf16.mxu0 0
    %212 = vmatpush1.bf16.msra.mxu0 0
    %213 = vmatprep.subr.bf16.mxu0 0
    %214 = vmatpush1.bf16.msra.mxu0 0
    %215 = vmatprep.subr.bf16.mxu0 0
    %216 = vmatpush1.bf16.msra.mxu0 0
    %217 = vmatprep.subr.bf16.mxu0 0
    %218 = vmatpush1.bf16.msra.mxu0 0
    %219 = vmatprep.subr.bf16.mxu0 0
    %220 = vmatpush1.bf16.msra.mxu0 0
    %221 = vmatprep.subr.bf16.mxu0 0
    %222 = vmatpush1.bf16.msra.mxu0 0
    %223 = vmatprep.subr.bf16.mxu0 0
    %224 = vmatpush1.bf16.msra.mxu0 0
    %225 = vmatprep.subr.bf16.mxu0 0
    %226 = vmatpush1.bf16.msra.mxu0 0
    %227 = vmatprep.subr.bf16.mxu0 0
    %228 = vmatpush1.bf16.msra.mxu0 0
    %229 = vmatprep.subr.bf16.mxu0 0
    %230 = vmatpush1.bf16.msra.mxu0 0
    %231 = vmatprep.mubr.bf16.mxu0 0
    %232 = vmatmul.mubr.bf16.gmra.mrb[0].mxu0 %v178
    %v233 = vpop.f32.mrb[0].mxu0
    %v234 = vadd.f32 0.0, %v233
    %v235 = vpop.f32.mrb[0].mxu0
    %v236 = vadd.f32 0.0, %v235
    %v237 = vpop.f32.mrb[0].mxu0
    %v238 = vadd.f32 0.0, %v237
    %v239 = vpop.f32.mrb[0].mxu0
    %v240 = vadd.f32 0.0, %v239
    %241 = vmatprep.mubr.bf16.mxu0 0
    %242 = vmatmul.mubr.bf16.gmra.mrb[0].mxu0 %v181
    %v243 = vpop.f32.mrb[0].mxu0
    %v244 = vadd.f32 0.0, %v243
    %v245 = vpop.f32.mrb[0].mxu0
    %v246 = vadd.f32 0.0, %v245
    %v247 = vpop.f32.mrb[0].mxu0
    %v248 = vadd.f32 0.0, %v247
    %v249 = vpop.f32.mrb[0].mxu0
    %v250 = vadd.f32 0.0, %v249
    %251 = vdwg.mxu0
    %252 = vmatprep.subr.bf16.mxu0 %v197
    %253 = vmatpush1.bf16.msra.mxu0 %v194
    %254 = vmatprep.subr.bf16.mxu0 0
    %255 = vmatpush1.bf16.msra.mxu0 0
    %256 = vmatprep.subr.bf16.mxu0 0
    %257 = vmatpush1.bf16.msra.mxu0 0
    %258 = vmatprep.subr.bf16.mxu0 0
    %259 = vmatpush1.bf16.msra.mxu0 0
    %260 = vmatprep.subr.bf16.mxu0 0
    %261 = vmatpush1.bf16.msra.mxu0 0
    %262 = vmatprep.subr.bf16.mxu0 0
    %263 = vmatpush1.bf16.msra.mxu0 0
    %264 = vmatprep.subr.bf16.mxu0 0
    %265 = vmatpush1.bf16.msra.mxu0 0
    %266 = vmatprep.subr.bf16.mxu0 0
    %267 = vmatpush1.bf16.msra.mxu0 0
    %268 = vmatprep.subr.bf16.mxu0 0
    %269 = vmatpush1.bf16.msra.mxu0 0
    %270 = vmatprep.subr.bf16.mxu0 0
    %271 = vmatpush1.bf16.msra.mxu0 0
    %272 = vmatprep.subr.bf16.mxu0 0
    %273 = vmatpush1.bf16.msra.mxu0 0
    %274 = vmatprep.subr.bf16.mxu0 0
    %275 = vmatpush1.bf16.msra.mxu0 0
    %276 = vmatprep.subr.bf16.mxu0 0
    %277 = vmatpush1.bf16.msra.mxu0 0
    %278 = vmatprep.subr.bf16.mxu0 0
    %279 = vmatpush1.bf16.msra.mxu0 0
    %280 = vmatprep.subr.bf16.mxu0 0
    %281 = vmatpush1.bf16.msra.mxu0 0
    %282 = vmatprep.subr.bf16.mxu0 0
    %283 = vmatpush1.bf16.msra.mxu0 0
    %284 = vmatprep.mubr.bf16.mxu0 0
    %285 = vmatmul.mubr.bf16.gmra.mrb[0].mxu0 %v178
    %v286 = vpop.f32.mrb[0].mxu0
    %v287 = vadd.f32 0.0, %v286
    %v288 = vpop.f32.mrb[0].mxu0
    %v289 = vadd.f32 0.0, %v288
    %v290 = vpop.f32.mrb[0].mxu0
    %v291 = vadd.f32 0.0, %v290
    %v292 = vpop.f32.mrb[0].mxu0
    %v293 = vadd.f32 0.0, %v292
    %294 = vmatprep.mubr.bf16.mxu0 0
    %295 = vmatmul.mubr.bf16.gmra.mrb[0].mxu0 %v181
    %v296 = vpop.f32.mrb[0].mxu0
    %v297 = vadd.f32 0.0, %v296
    %v298 = vpop.f32.mrb[0].mxu0
    %v299 = vadd.f32 0.0, %v298
    %v300 = vpop.f32.mrb[0].mxu0
    %v301 = vadd.f32 0.0, %v300
    %v302 = vpop.f32.mrb[0].mxu0
    %v303 = vadd.f32 0.0, %v302
    %304 = vdwg.mxu0
    %v309 = vunpack.c.l.b16 %v109
    %v310 = vunpack.c.l.b16 %v110
    %v311 = vunpack.c.l.b16 %v111
    %v312 = vunpack.c.l.b16 %v112
    %v313 = vpack.c.b16 %v310, %v309
    %v314 = vpack.c.b16 %v312, %v311
    %v316 = vsel %vm176, %v313, 0
    %v319 = vsel %vm176, %v314, 0
    %v322 = vand.u32 %v113, %v186
    %v325 = vand.u32 %v114, %v186
    %v328 = vand.u32 %v115, %v186
    %v331 = vand.u32 %v116, %v186
    %333 = vmatprep.subr.bf16.mxu0 %v325
    %334 = vmatpush1.bf16.msra.mxu0 %v322
    %335 = vmatprep.subr.bf16.mxu0 0
    %336 = vmatpush1.bf16.msra.mxu0 0
    %337 = vmatprep.subr.bf16.mxu0 0
    %338 = vmatpush1.bf16.msra.mxu0 0
    %339 = vmatprep.subr.bf16.mxu0 0
    %340 = vmatpush1.bf16.msra.mxu0 0
    %341 = vmatprep.subr.bf16.mxu0 0
    %342 = vmatpush1.bf16.msra.mxu0 0
    %343 = vmatprep.subr.bf16.mxu0 0
    %344 = vmatpush1.bf16.msra.mxu0 0
    %345 = vmatprep.subr.bf16.mxu0 0
    %346 = vmatpush1.bf16.msra.mxu0 0
    %347 = vmatprep.subr.bf16.mxu0 0
    %348 = vmatpush1.bf16.msra.mxu0 0
    %349 = vmatprep.subr.bf16.mxu0 0
    %350 = vmatpush1.bf16.msra.mxu0 0
    %351 = vmatprep.subr.bf16.mxu0 0
    %352 = vmatpush1.bf16.msra.mxu0 0
    %353 = vmatprep.subr.bf16.mxu0 0
    %354 = vmatpush1.bf16.msra.mxu0 0
    %355 = vmatprep.subr.bf16.mxu0 0
    %356 = vmatpush1.bf16.msra.mxu0 0
    %357 = vmatprep.subr.bf16.mxu0 0
    %358 = vmatpush1.bf16.msra.mxu0 0
    %359 = vmatprep.subr.bf16.mxu0 0
    %360 = vmatpush1.bf16.msra.mxu0 0
    %361 = vmatprep.subr.bf16.mxu0 0
    %362 = vmatpush1.bf16.msra.mxu0 0
    %363 = vmatprep.subr.bf16.mxu0 0
    %364 = vmatpush1.bf16.msra.mxu0 0
    %365 = vmatprep.mubr.bf16.mxu0 0
    %366 = vmatmul.mubr.bf16.gmra.mrb[0].mxu0 %v316
    %v367 = vpop.f32.mrb[0].mxu0
    %v368 = vadd.f32 %v234, %v367
    %v369 = vpop.f32.mrb[0].mxu0
    %v370 = vadd.f32 %v236, %v369
    %v371 = vpop.f32.mrb[0].mxu0
    %v372 = vadd.f32 %v238, %v371
    %v373 = vpop.f32.mrb[0].mxu0
    %v374 = vadd.f32 %v240, %v373
    %375 = vmatprep.mubr.bf16.mxu0 0
    %376 = vmatmul.mubr.bf16.gmra.mrb[0].mxu0 %v319
    %v377 = vpop.f32.mrb[0].mxu0
    %v378 = vadd.f32 %v244, %v377
    %v379 = vpop.f32.mrb[0].mxu0
    %v380 = vadd.f32 %v246, %v379
    %v381 = vpop.f32.mrb[0].mxu0
    %v382 = vadd.f32 %v248, %v381
    %v383 = vpop.f32.mrb[0].mxu0
    %v384 = vadd.f32 %v250, %v383
    %385 = vdwg.mxu0
    %386 = vmatprep.subr.bf16.mxu0 %v331
    %387 = vmatpush1.bf16.msra.mxu0 %v328
    %388 = vmatprep.subr.bf16.mxu0 0
    %389 = vmatpush1.bf16.msra.mxu0 0
    %390 = vmatprep.subr.bf16.mxu0 0
    %391 = vmatpush1.bf16.msra.mxu0 0
    %392 = vmatprep.subr.bf16.mxu0 0
    %393 = vmatpush1.bf16.msra.mxu0 0
    %394 = vmatprep.subr.bf16.mxu0 0
    %395 = vmatpush1.bf16.msra.mxu0 0
    %396 = vmatprep.subr.bf16.mxu0 0
    %397 = vmatpush1.bf16.msra.mxu0 0
    %398 = vmatprep.subr.bf16.mxu0 0
    %399 = vmatpush1.bf16.msra.mxu0 0
    %400 = vmatprep.subr.bf16.mxu0 0
    %401 = vmatpush1.bf16.msra.mxu0 0
    %402 = vmatprep.subr.bf16.mxu0 0
    %403 = vmatpush1.bf16.msra.mxu0 0
    %404 = vmatprep.subr.bf16.mxu0 0
    %405 = vmatpush1.bf16.msra.mxu0 0
    %406 = vmatprep.subr.bf16.mxu0 0
    %407 = vmatpush1.bf16.msra.mxu0 0
    %408 = vmatprep.subr.bf16.mxu0 0
    %409 = vmatpush1.bf16.msra.mxu0 0
    %410 = vmatprep.subr.bf16.mxu0 0
    %411 = vmatpush1.bf16.msra.mxu0 0
    %412 = vmatprep.subr.bf16.mxu0 0
    %413 = vmatpush1.bf16.msra.mxu0 0
    %414 = vmatprep.subr.bf16.mxu0 0
    %415 = vmatpush1.bf16.msra.mxu0 0
    %416 = vmatprep.subr.bf16.mxu0 0
    %417 = vmatpush1.bf16.msra.mxu0 0
    %418 = vmatprep.mubr.bf16.mxu0 0
    %419 = vmatmul.mubr.bf16.gmra.mrb[0].mxu0 %v316
    %v420 = vpop.f32.mrb[0].mxu0
    %v421 = vadd.f32 %v287, %v420
    %v422 = vpop.f32.mrb[0].mxu0
    %v423 = vadd.f32 %v289, %v422
    %v424 = vpop.f32.mrb[0].mxu0
    %v425 = vadd.f32 %v291, %v424
    %v426 = vpop.f32.mrb[0].mxu0
    %v427 = vadd.f32 %v293, %v426
    %428 = vmatprep.mubr.bf16.mxu0 0
    %429 = vmatmul.mubr.bf16.gmra.mrb[0].mxu0 %v319
    %v430 = vpop.f32.mrb[0].mxu0
    %v431 = vadd.f32 %v297, %v430
    %v432 = vpop.f32.mrb[0].mxu0
    %v433 = vadd.f32 %v299, %v432
    %v434 = vpop.f32.mrb[0].mxu0
    %v435 = vadd.f32 %v301, %v434
    %v436 = vpop.f32.mrb[0].mxu0
    %v437 = vadd.f32 %v303, %v436
    %438 = vdwg.mxu0
    %439 = vrot.lane.b32.xlu0 %v60, 15
    %v440 = vpop.permute.xlu0 %439
    %441 = vrot.lane.b32.xlu0 %v64, 15
    %v442 = vpop.permute.xlu0 %441
    %443 = vrot.lane.b32.xlu0 %v61, 15
    %v444 = vpop.permute.xlu0 %443
    %445 = vrot.lane.b32.xlu0 %v65, 15
    %v446 = vpop.permute.xlu0 %445
    %vm447 = vcmp.lt.s32.totalorder %v77, 15
    %v448 = vsel %vm447, %v444, %v446
    %v449 = vsel %vm447, %v442, %v444
    %v450 = vsel %vm447, %v440, %v442
    %v451 = vsel %vm447, %v446, %v440
    %s452 = scalar_lea.vmem %s2, 8
    %v453 = vld [vmem:[%s452] sm:$0xf]
    %v455 = vlaneseq
    %v456 = vshrl.u32 %v455, 7
    %v457 = vsub.s32 0, %v456
    %v458 = vrot.slane %v453, %v457
    %v459 = vlaneseq
    %v460 = vshrl.u32 %v459, 7
    %v461 = vsub.s32 1, %v460
    %v462 = vrot.slane %v453, %v461
    %v463 = vlaneseq
    %v464 = vshrl.u32 %v463, 7
    %v465 = vsub.s32 2, %v464
    %v466 = vrot.slane %v453, %v465
    %v467 = vlaneseq
    %v468 = vshrl.u32 %v467, 7
    %v469 = vsub.s32 3, %v468
    %v470 = vrot.slane %v453, %v469
    %v475 = vmul.f32 %v451, %v458
    %v476 = vmul.f32 %v450, %v462
    %v477 = vmul.f32 %v449, %v466
    %v478 = vmul.f32 %v448, %v470
    %s479 = scalar_lea.vmem %s3, 32
    %v480 = vld [vmem:[%s479] sm:$0xf]
    %v481 = vld [vmem:[%s479 + $0x4] sm:$0xf]
    %v482 = vld [vmem:[%s479 + $0x8] sm:$0xf]
    %v483 = vld [vmem:[%s479 + $0xc] sm:$0xf]
    %v484 = vpack.c.bf16 %v475, %v475
    %v485 = vpack.c.bf16 %v476, %v476
    %v486 = vpack.c.bf16 %v477, %v477
    %v487 = vpack.c.bf16 %v478, %v478
    %v492 = vunpack.c.l.b16 %v480
    %v493 = vunpack.c.l.b16 %v481
    %v494 = vunpack.c.l.b16 %v482
    %v495 = vunpack.c.l.b16 %v483
    %v496 = vpack.c.b16 %v493, %v492
    %v497 = vpack.c.b16 %v495, %v494
    %v499 = vsel %vm176, %v496, 0
    %v502 = vsel %vm176, %v497, 0
    %v505 = vand.u32 %v484, %v186
    %v508 = vand.u32 %v485, %v186
    %v511 = vand.u32 %v486, %v186
    %v514 = vand.u32 %v487, %v186
    %516 = vmatprep.subr.bf16.mxu0 %v508
    %517 = vmatpush1.bf16.msra.mxu0 %v505
    %518 = vmatprep.subr.bf16.mxu0 0
    %519 = vmatpush1.bf16.msra.mxu0 0
    %520 = vmatprep.subr.bf16.mxu0 0
    %521 = vmatpush1.bf16.msra.mxu0 0
    %522 = vmatprep.subr.bf16.mxu0 0
    %523 = vmatpush1.bf16.msra.mxu0 0
    %524 = vmatprep.subr.bf16.mxu0 0
    %525 = vmatpush1.bf16.msra.mxu0 0
    %526 = vmatprep.subr.bf16.mxu0 0
    %527 = vmatpush1.bf16.msra.mxu0 0
    %528 = vmatprep.subr.bf16.mxu0 0
    %529 = vmatpush1.bf16.msra.mxu0 0
    %530 = vmatprep.subr.bf16.mxu0 0
    %531 = vmatpush1.bf16.msra.mxu0 0
    %532 = vmatprep.subr.bf16.mxu0 0
    %533 = vmatpush1.bf16.msra.mxu0 0
    %534 = vmatprep.subr.bf16.mxu0 0
    %535 = vmatpush1.bf16.msra.mxu0 0
    %536 = vmatprep.subr.bf16.mxu0 0
    %537 = vmatpush1.bf16.msra.mxu0 0
    %538 = vmatprep.subr.bf16.mxu0 0
    %539 = vmatpush1.bf16.msra.mxu0 0
    %540 = vmatprep.subr.bf16.mxu0 0
    %541 = vmatpush1.bf16.msra.mxu0 0
    %542 = vmatprep.subr.bf16.mxu0 0
    %543 = vmatpush1.bf16.msra.mxu0 0
    %544 = vmatprep.subr.bf16.mxu0 0
    %545 = vmatpush1.bf16.msra.mxu0 0
    %546 = vmatprep.subr.bf16.mxu0 0
    %547 = vmatpush1.bf16.msra.mxu0 0
    %548 = vmatprep.mubr.bf16.mxu0 0
    %549 = vmatmul.mubr.bf16.gmra.mrb[0].mxu0 %v499
    %v550 = vpop.f32.mrb[0].mxu0
    %v551 = vadd.f32 0.0, %v550
    %v552 = vpop.f32.mrb[0].mxu0
    %v553 = vadd.f32 0.0, %v552
    %v554 = vpop.f32.mrb[0].mxu0
    %v555 = vadd.f32 0.0, %v554
    %v556 = vpop.f32.mrb[0].mxu0
    %v557 = vadd.f32 0.0, %v556
    %558 = vmatprep.mubr.bf16.mxu0 0
    %559 = vmatmul.mubr.bf16.gmra.mrb[0].mxu0 %v502
    %v560 = vpop.f32.mrb[0].mxu0
    %v561 = vadd.f32 0.0, %v560
    %v562 = vpop.f32.mrb[0].mxu0
    %v563 = vadd.f32 0.0, %v562
    %v564 = vpop.f32.mrb[0].mxu0
    %v565 = vadd.f32 0.0, %v564
    %v566 = vpop.f32.mrb[0].mxu0
    %v567 = vadd.f32 0.0, %v566
    %568 = vdwg.mxu0
    %569 = vmatprep.subr.bf16.mxu0 %v514
    %570 = vmatpush1.bf16.msra.mxu0 %v511
    %571 = vmatprep.subr.bf16.mxu0 0
    %572 = vmatpush1.bf16.msra.mxu0 0
    %573 = vmatprep.subr.bf16.mxu0 0
    %574 = vmatpush1.bf16.msra.mxu0 0
    %575 = vmatprep.subr.bf16.mxu0 0
    %576 = vmatpush1.bf16.msra.mxu0 0
    %577 = vmatprep.subr.bf16.mxu0 0
    %578 = vmatpush1.bf16.msra.mxu0 0
    %579 = vmatprep.subr.bf16.mxu0 0
    %580 = vmatpush1.bf16.msra.mxu0 0
    %581 = vmatprep.subr.bf16.mxu0 0
    %582 = vmatpush1.bf16.msra.mxu0 0
    %583 = vmatprep.subr.bf16.mxu0 0
    %584 = vmatpush1.bf16.msra.mxu0 0
    %585 = vmatprep.subr.bf16.mxu0 0
    %586 = vmatpush1.bf16.msra.mxu0 0
    %587 = vmatprep.subr.bf16.mxu0 0
    %588 = vmatpush1.bf16.msra.mxu0 0
    %589 = vmatprep.subr.bf16.mxu0 0
    %590 = vmatpush1.bf16.msra.mxu0 0
    %591 = vmatprep.subr.bf16.mxu0 0
    %592 = vmatpush1.bf16.msra.mxu0 0
    %593 = vmatprep.subr.bf16.mxu0 0
    %594 = vmatpush1.bf16.msra.mxu0 0
    %595 = vmatprep.subr.bf16.mxu0 0
    %596 = vmatpush1.bf16.msra.mxu0 0
    %597 = vmatprep.subr.bf16.mxu0 0
    %598 = vmatpush1.bf16.msra.mxu0 0
    %599 = vmatprep.subr.bf16.mxu0 0
    %600 = vmatpush1.bf16.msra.mxu0 0
    %601 = vmatprep.mubr.bf16.mxu0 0
    %602 = vmatmul.mubr.bf16.gmra.mrb[0].mxu0 %v499
    %v603 = vpop.f32.mrb[0].mxu0
    %v604 = vadd.f32 0.0, %v603
    %v605 = vpop.f32.mrb[0].mxu0
    %v606 = vadd.f32 0.0, %v605
    %v607 = vpop.f32.mrb[0].mxu0
    %v608 = vadd.f32 0.0, %v607
    %v609 = vpop.f32.mrb[0].mxu0
    %v610 = vadd.f32 0.0, %v609
    %611 = vmatprep.mubr.bf16.mxu0 0
    %612 = vmatmul.mubr.bf16.gmra.mrb[0].mxu0 %v502
    %v613 = vpop.f32.mrb[0].mxu0
    %v614 = vadd.f32 0.0, %v613
    %v615 = vpop.f32.mrb[0].mxu0
    %v616 = vadd.f32 0.0, %v615
    %v617 = vpop.f32.mrb[0].mxu0
    %v618 = vadd.f32 0.0, %v617
    %v619 = vpop.f32.mrb[0].mxu0
    %v620 = vadd.f32 0.0, %v619
    %621 = vdwg.mxu0
    %v622 = vadd.f32 %v368, %v551
    %v623 = vadd.f32 %v370, %v553
    %v624 = vadd.f32 %v421, %v604
    %v625 = vadd.f32 %v423, %v606
    %v626 = vadd.f32 %v372, %v555
    %v627 = vadd.f32 %v374, %v557
    %v628 = vadd.f32 %v425, %v608
    %v629 = vadd.f32 %v427, %v610
    %v630 = vadd.f32 %v378, %v561
    %v631 = vadd.f32 %v380, %v563
    %v632 = vadd.f32 %v431, %v614
    %v633 = vadd.f32 %v433, %v616
    %v634 = vadd.f32 %v382, %v565
    %v635 = vadd.f32 %v384, %v567
    %v636 = vadd.f32 %v435, %v618
    %v637 = vadd.f32 %v437, %v620
    %638 = vrot.lane.b32.xlu0 %v60, 1
    %v639 = vpop.permute.xlu0 %638
    %640 = vrot.lane.b32.xlu0 %v64, 1
    %v641 = vpop.permute.xlu0 %640
    %642 = vrot.lane.b32.xlu0 %v61, 1
    %v643 = vpop.permute.xlu0 %642
    %644 = vrot.lane.b32.xlu0 %v65, 1
    %v645 = vpop.permute.xlu0 %644
    %vm646 = vcmp.lt.s32.totalorder %v77, 1
    %v647 = vsel %vm646, %v643, %v645
    %v648 = vsel %vm646, %v641, %v643
    %v649 = vsel %vm646, %v639, %v641
    %v650 = vsel %vm646, %v645, %v639
    %s651 = scalar_lea.vmem %s2, 12
    %v652 = vld [vmem:[%s651] sm:$0xf]
    %v654 = vlaneseq
    %v655 = vshrl.u32 %v654, 7
    %v656 = vsub.s32 0, %v655
    %v657 = vrot.slane %v652, %v656
    %v658 = vlaneseq
    %v659 = vshrl.u32 %v658, 7
    %v660 = vsub.s32 1, %v659
    %v661 = vrot.slane %v652, %v660
    %v662 = vlaneseq
    %v663 = vshrl.u32 %v662, 7
    %v664 = vsub.s32 2, %v663
    %v665 = vrot.slane %v652, %v664
    %v666 = vlaneseq
    %v667 = vshrl.u32 %v666, 7
    %v668 = vsub.s32 3, %v667
    %v669 = vrot.slane %v652, %v668
    %v674 = vmul.f32 %v650, %v657
    %v675 = vmul.f32 %v649, %v661
    %v676 = vmul.f32 %v648, %v665
    %v677 = vmul.f32 %v647, %v669
    %s678 = scalar_lea.vmem %s3, 48
    %v679 = vld [vmem:[%s678] sm:$0xf]
    %v680 = vld [vmem:[%s678 + $0x4] sm:$0xf]
    %v681 = vld [vmem:[%s678 + $0x8] sm:$0xf]
    %v682 = vld [vmem:[%s678 + $0xc] sm:$0xf]
    %v683 = vpack.c.bf16 %v674, %v674
    %v684 = vpack.c.bf16 %v675, %v675
    %v685 = vpack.c.bf16 %v676, %v676
    %v686 = vpack.c.bf16 %v677, %v677
    %v691 = vunpack.c.l.b16 %v679
    %v692 = vunpack.c.l.b16 %v680
    %v693 = vunpack.c.l.b16 %v681
    %v694 = vunpack.c.l.b16 %v682
    %v695 = vpack.c.b16 %v692, %v691
    %v696 = vpack.c.b16 %v694, %v693
    %v698 = vsel %vm176, %v695, 0
    %v701 = vsel %vm176, %v696, 0
    %v704 = vand.u32 %v683, %v186
    %v707 = vand.u32 %v684, %v186
    %v710 = vand.u32 %v685, %v186
    %v713 = vand.u32 %v686, %v186
    %715 = vmatprep.subr.bf16.mxu0 %v707
    %716 = vmatpush1.bf16.msra.mxu0 %v704
    %717 = vmatprep.subr.bf16.mxu0 0
    %718 = vmatpush1.bf16.msra.mxu0 0
    %719 = vmatprep.subr.bf16.mxu0 0
    %720 = vmatpush1.bf16.msra.mxu0 0
    %721 = vmatprep.subr.bf16.mxu0 0
    %722 = vmatpush1.bf16.msra.mxu0 0
    %723 = vmatprep.subr.bf16.mxu0 0
    %724 = vmatpush1.bf16.msra.mxu0 0
    %725 = vmatprep.subr.bf16.mxu0 0
    %726 = vmatpush1.bf16.msra.mxu0 0
    %727 = vmatprep.subr.bf16.mxu0 0
    %728 = vmatpush1.bf16.msra.mxu0 0
    %729 = vmatprep.subr.bf16.mxu0 0
    %730 = vmatpush1.bf16.msra.mxu0 0
    %731 = vmatprep.subr.bf16.mxu0 0
    %732 = vmatpush1.bf16.msra.mxu0 0
    %733 = vmatprep.subr.bf16.mxu0 0
    %734 = vmatpush1.bf16.msra.mxu0 0
    %735 = vmatprep.subr.bf16.mxu0 0
    %736 = vmatpush1.bf16.msra.mxu0 0
    %737 = vmatprep.subr.bf16.mxu0 0
    %738 = vmatpush1.bf16.msra.mxu0 0
    %739 = vmatprep.subr.bf16.mxu0 0
    %740 = vmatpush1.bf16.msra.mxu0 0
    %741 = vmatprep.subr.bf16.mxu0 0
    %742 = vmatpush1.bf16.msra.mxu0 0
    %743 = vmatprep.subr.bf16.mxu0 0
    %744 = vmatpush1.bf16.msra.mxu0 0
    %745 = vmatprep.subr.bf16.mxu0 0
    %746 = vmatpush1.bf16.msra.mxu0 0
    %747 = vmatprep.mubr.bf16.mxu0 0
    %748 = vmatmul.mubr.bf16.gmra.mrb[0].mxu0 %v698
    %v749 = vpop.f32.mrb[0].mxu0
    %v750 = vadd.f32 0.0, %v749
    %v751 = vpop.f32.mrb[0].mxu0
    %v752 = vadd.f32 0.0, %v751
    %v753 = vpop.f32.mrb[0].mxu0
    %v754 = vadd.f32 0.0, %v753
    %v755 = vpop.f32.mrb[0].mxu0
    %v756 = vadd.f32 0.0, %v755
    %757 = vmatprep.mubr.bf16.mxu0 0
    %758 = vmatmul.mubr.bf16.gmra.mrb[0].mxu0 %v701
    %v759 = vpop.f32.mrb[0].mxu0
    %v760 = vadd.f32 0.0, %v759
    %v761 = vpop.f32.mrb[0].mxu0
    %v762 = vadd.f32 0.0, %v761
    %v763 = vpop.f32.mrb[0].mxu0
    %v764 = vadd.f32 0.0, %v763
    %v765 = vpop.f32.mrb[0].mxu0
    %v766 = vadd.f32 0.0, %v765
    %767 = vdwg.mxu0
    %768 = vmatprep.subr.bf16.mxu0 %v713
    %769 = vmatpush1.bf16.msra.mxu0 %v710
    %770 = vmatprep.subr.bf16.mxu0 0
    %771 = vmatpush1.bf16.msra.mxu0 0
    %772 = vmatprep.subr.bf16.mxu0 0
    %773 = vmatpush1.bf16.msra.mxu0 0
    %774 = vmatprep.subr.bf16.mxu0 0
    %775 = vmatpush1.bf16.msra.mxu0 0
    %776 = vmatprep.subr.bf16.mxu0 0
    %777 = vmatpush1.bf16.msra.mxu0 0
    %778 = vmatprep.subr.bf16.mxu0 0
    %779 = vmatpush1.bf16.msra.mxu0 0
    %780 = vmatprep.subr.bf16.mxu0 0
    %781 = vmatpush1.bf16.msra.mxu0 0
    %782 = vmatprep.subr.bf16.mxu0 0
    %783 = vmatpush1.bf16.msra.mxu0 0
    %784 = vmatprep.subr.bf16.mxu0 0
    %785 = vmatpush1.bf16.msra.mxu0 0
    %786 = vmatprep.subr.bf16.mxu0 0
    %787 = vmatpush1.bf16.msra.mxu0 0
    %788 = vmatprep.subr.bf16.mxu0 0
    %789 = vmatpush1.bf16.msra.mxu0 0
    %790 = vmatprep.subr.bf16.mxu0 0
    %791 = vmatpush1.bf16.msra.mxu0 0
    %792 = vmatprep.subr.bf16.mxu0 0
    %793 = vmatpush1.bf16.msra.mxu0 0
    %794 = vmatprep.subr.bf16.mxu0 0
    %795 = vmatpush1.bf16.msra.mxu0 0
    %796 = vmatprep.subr.bf16.mxu0 0
    %797 = vmatpush1.bf16.msra.mxu0 0
    %798 = vmatprep.subr.bf16.mxu0 0
    %799 = vmatpush1.bf16.msra.mxu0 0
    %800 = vmatprep.mubr.bf16.mxu0 0
    %801 = vmatmul.mubr.bf16.gmra.mrb[0].mxu0 %v698
    %v802 = vpop.f32.mrb[0].mxu0
    %v803 = vadd.f32 0.0, %v802
    %v804 = vpop.f32.mrb[0].mxu0
    %v805 = vadd.f32 0.0, %v804
    %v806 = vpop.f32.mrb[0].mxu0
    %v807 = vadd.f32 0.0, %v806
    %v808 = vpop.f32.mrb[0].mxu0
    %v809 = vadd.f32 0.0, %v808
    %810 = vmatprep.mubr.bf16.mxu0 0
    %811 = vmatmul.mubr.bf16.gmra.mrb[0].mxu0 %v701
    %v812 = vpop.f32.mrb[0].mxu0
    %v813 = vadd.f32 0.0, %v812
    %v814 = vpop.f32.mrb[0].mxu0
    %v815 = vadd.f32 0.0, %v814
    %v816 = vpop.f32.mrb[0].mxu0
    %v817 = vadd.f32 0.0, %v816
    %v818 = vpop.f32.mrb[0].mxu0
    %v819 = vadd.f32 0.0, %v818
    %820 = vdwg.mxu0
    %v821 = vadd.f32 %v622, %v750
    %v822 = vadd.f32 %v623, %v752
    %v823 = vadd.f32 %v624, %v803
    %v824 = vadd.f32 %v625, %v805
    %v825 = vadd.f32 %v626, %v754
    %v826 = vadd.f32 %v627, %v756
    %v827 = vadd.f32 %v628, %v807
    %v828 = vadd.f32 %v629, %v809
    %v829 = vadd.f32 %v630, %v760
    %v830 = vadd.f32 %v631, %v762
    %v831 = vadd.f32 %v632, %v813
    %v832 = vadd.f32 %v633, %v815
    %v833 = vadd.f32 %v634, %v764
    %v834 = vadd.f32 %v635, %v766
    %v835 = vadd.f32 %v636, %v817
    %v836 = vadd.f32 %v637, %v819
    %s837 = scalar_lea.vmem %s3, 64
    %v838 = vld [vmem:[%s837] sm:$0xf]
    %v839 = vld [vmem:[%s837 + $0x4] sm:$0xf]
    %v840 = vld [vmem:[%s837 + $0x8] sm:$0xf]
    %v841 = vld [vmem:[%s837 + $0xc] sm:$0xf]
    %v842 = vpack.c.bf16 %v60, %v60
    %v843 = vpack.c.bf16 %v64, %v64
    %v844 = vpack.c.bf16 %v61, %v61
    %v845 = vpack.c.bf16 %v65, %v65
    %v850 = vunpack.c.l.b16 %v838
    %v851 = vunpack.c.l.b16 %v839
    %v852 = vunpack.c.l.b16 %v840
    %v853 = vunpack.c.l.b16 %v841
    %v854 = vpack.c.b16 %v851, %v850
    %v855 = vpack.c.b16 %v853, %v852
    %v857 = vsel %vm176, %v854, 0
    %v860 = vsel %vm176, %v855, 0
    %v863 = vand.u32 %v842, %v186
    %v866 = vand.u32 %v843, %v186
    %v869 = vand.u32 %v844, %v186
    %v872 = vand.u32 %v845, %v186
    %874 = vmatprep.subr.bf16.mxu0 %v866
    %875 = vmatpush1.bf16.msra.mxu0 %v863
    %876 = vmatprep.subr.bf16.mxu0 0
    %877 = vmatpush1.bf16.msra.mxu0 0
    %878 = vmatprep.subr.bf16.mxu0 0
    %879 = vmatpush1.bf16.msra.mxu0 0
    %880 = vmatprep.subr.bf16.mxu0 0
    %881 = vmatpush1.bf16.msra.mxu0 0
    %882 = vmatprep.subr.bf16.mxu0 0
    %883 = vmatpush1.bf16.msra.mxu0 0
    %884 = vmatprep.subr.bf16.mxu0 0
    %885 = vmatpush1.bf16.msra.mxu0 0
    %886 = vmatprep.subr.bf16.mxu0 0
    %887 = vmatpush1.bf16.msra.mxu0 0
    %888 = vmatprep.subr.bf16.mxu0 0
    %889 = vmatpush1.bf16.msra.mxu0 0
    %890 = vmatprep.subr.bf16.mxu0 0
    %891 = vmatpush1.bf16.msra.mxu0 0
    %892 = vmatprep.subr.bf16.mxu0 0
    %893 = vmatpush1.bf16.msra.mxu0 0
    %894 = vmatprep.subr.bf16.mxu0 0
    %895 = vmatpush1.bf16.msra.mxu0 0
    %896 = vmatprep.subr.bf16.mxu0 0
    %897 = vmatpush1.bf16.msra.mxu0 0
    %898 = vmatprep.subr.bf16.mxu0 0
    %899 = vmatpush1.bf16.msra.mxu0 0
    %900 = vmatprep.subr.bf16.mxu0 0
    %901 = vmatpush1.bf16.msra.mxu0 0
    %902 = vmatprep.subr.bf16.mxu0 0
    %903 = vmatpush1.bf16.msra.mxu0 0
    %904 = vmatprep.subr.bf16.mxu0 0
    %905 = vmatpush1.bf16.msra.mxu0 0
    %906 = vmatprep.mubr.bf16.mxu0 0
    %907 = vmatmul.mubr.bf16.gmra.mrb[0].mxu0 %v857
    %v908 = vpop.f32.mrb[0].mxu0
    %v909 = vadd.f32 0.0, %v908
    %v910 = vpop.f32.mrb[0].mxu0
    %v911 = vadd.f32 0.0, %v910
    %v912 = vpop.f32.mrb[0].mxu0
    %v913 = vadd.f32 0.0, %v912
    %v914 = vpop.f32.mrb[0].mxu0
    %v915 = vadd.f32 0.0, %v914
    %916 = vmatprep.mubr.bf16.mxu0 0
    %917 = vmatmul.mubr.bf16.gmra.mrb[0].mxu0 %v860
    %v918 = vpop.f32.mrb[0].mxu0
    %v919 = vadd.f32 0.0, %v918
    %v920 = vpop.f32.mrb[0].mxu0
    %v921 = vadd.f32 0.0, %v920
    %v922 = vpop.f32.mrb[0].mxu0
    %v923 = vadd.f32 0.0, %v922
    %v924 = vpop.f32.mrb[0].mxu0
    %v925 = vadd.f32 0.0, %v924
    %926 = vdwg.mxu0
    %927 = vmatprep.subr.bf16.mxu0 %v872
    %928 = vmatpush1.bf16.msra.mxu0 %v869
    %929 = vmatprep.subr.bf16.mxu0 0
    %930 = vmatpush1.bf16.msra.mxu0 0
    %931 = vmatprep.subr.bf16.mxu0 0
    %932 = vmatpush1.bf16.msra.mxu0 0
    %933 = vmatprep.subr.bf16.mxu0 0
    %934 = vmatpush1.bf16.msra.mxu0 0
    %935 = vmatprep.subr.bf16.mxu0 0
    %936 = vmatpush1.bf16.msra.mxu0 0
    %937 = vmatprep.subr.bf16.mxu0 0
    %938 = vmatpush1.bf16.msra.mxu0 0
    %939 = vmatprep.subr.bf16.mxu0 0
    %940 = vmatpush1.bf16.msra.mxu0 0
    %941 = vmatprep.subr.bf16.mxu0 0
    %942 = vmatpush1.bf16.msra.mxu0 0
    %943 = vmatprep.subr.bf16.mxu0 0
    %944 = vmatpush1.bf16.msra.mxu0 0
    %945 = vmatprep.subr.bf16.mxu0 0
    %946 = vmatpush1.bf16.msra.mxu0 0
    %947 = vmatprep.subr.bf16.mxu0 0
    %948 = vmatpush1.bf16.msra.mxu0 0
    %949 = vmatprep.subr.bf16.mxu0 0
    %950 = vmatpush1.bf16.msra.mxu0 0
    %951 = vmatprep.subr.bf16.mxu0 0
    %952 = vmatpush1.bf16.msra.mxu0 0
    %953 = vmatprep.subr.bf16.mxu0 0
    %954 = vmatpush1.bf16.msra.mxu0 0
    %955 = vmatprep.subr.bf16.mxu0 0
    %956 = vmatpush1.bf16.msra.mxu0 0
    %957 = vmatprep.subr.bf16.mxu0 0
    %958 = vmatpush1.bf16.msra.mxu0 0
    %959 = vmatprep.mubr.bf16.mxu0 0
    %960 = vmatmul.mubr.bf16.gmra.mrb[0].mxu0 %v857
    %v961 = vpop.f32.mrb[0].mxu0
    %v962 = vadd.f32 0.0, %v961
    %v963 = vpop.f32.mrb[0].mxu0
    %v964 = vadd.f32 0.0, %v963
    %v965 = vpop.f32.mrb[0].mxu0
    %v966 = vadd.f32 0.0, %v965
    %v967 = vpop.f32.mrb[0].mxu0
    %v968 = vadd.f32 0.0, %v967
    %969 = vmatprep.mubr.bf16.mxu0 0
    %970 = vmatmul.mubr.bf16.gmra.mrb[0].mxu0 %v860
    %v971 = vpop.f32.mrb[0].mxu0
    %v972 = vadd.f32 0.0, %v971
    %v973 = vpop.f32.mrb[0].mxu0
    %v974 = vadd.f32 0.0, %v973
    %v975 = vpop.f32.mrb[0].mxu0
    %v976 = vadd.f32 0.0, %v975
    %v977 = vpop.f32.mrb[0].mxu0
    %v978 = vadd.f32 0.0, %v977
    %979 = vdwg.mxu0
    %v980 = vadd.f32 %v821, %v909
    %v981 = vadd.f32 %v822, %v911
    %v982 = vadd.f32 %v823, %v962
    %v983 = vadd.f32 %v824, %v964
    %v984 = vadd.f32 %v825, %v913
    %v985 = vadd.f32 %v826, %v915
    %v986 = vadd.f32 %v827, %v966
    %v987 = vadd.f32 %v828, %v968
    %v988 = vadd.f32 %v829, %v919
    %v989 = vadd.f32 %v830, %v921
    %v990 = vadd.f32 %v831, %v972
    %v991 = vadd.f32 %v832, %v974
    %v992 = vadd.f32 %v833, %v923
    %v993 = vadd.f32 %v834, %v925
    %v994 = vadd.f32 %v835, %v976
    %v995 = vadd.f32 %v836, %v978
    %996 = vrot.lane.b32.xlu0 %v60, 127
    %v997 = vpop.permute.xlu0 %996
    %998 = vrot.lane.b32.xlu0 %v64, 127
    %v999 = vpop.permute.xlu0 %998
    %1000 = vrot.lane.b32.xlu0 %v61, 127
    %v1001 = vpop.permute.xlu0 %1000
    %1002 = vrot.lane.b32.xlu0 %v65, 127
    %v1003 = vpop.permute.xlu0 %1002
    %vm1004 = vcmp.lt.s32.totalorder %v77, 127
    %v1005 = vsel %vm1004, %v1001, %v1003
    %v1006 = vsel %vm1004, %v999, %v1001
    %v1007 = vsel %vm1004, %v997, %v999
    %v1008 = vsel %vm1004, %v1003, %v997
    %s1009 = scalar_lea.vmem %s2, 20
    %v1010 = vld [vmem:[%s1009] sm:$0xf]
    %v1012 = vlaneseq
    %v1013 = vshrl.u32 %v1012, 7
    %v1014 = vsub.s32 0, %v1013
    %v1015 = vrot.slane %v1010, %v1014
    %v1016 = vlaneseq
    %v1017 = vshrl.u32 %v1016, 7
    %v1018 = vsub.s32 1, %v1017
    %v1019 = vrot.slane %v1010, %v1018
    %v1020 = vlaneseq
    %v1021 = vshrl.u32 %v1020, 7
    %v1022 = vsub.s32 2, %v1021
    %v1023 = vrot.slane %v1010, %v1022
    %v1024 = vlaneseq
    %v1025 = vshrl.u32 %v1024, 7
    %v1026 = vsub.s32 3, %v1025
    %v1027 = vrot.slane %v1010, %v1026
    %v1032 = vmul.f32 %v1007, %v1015
    %v1033 = vmul.f32 %v1006, %v1019
    %v1034 = vmul.f32 %v1005, %v1023
    %v1035 = vmul.f32 %v1008, %v1027
    %s1036 = scalar_lea.vmem %s3, 80
    %v1037 = vld [vmem:[%s1036] sm:$0xf]
    %v1038 = vld [vmem:[%s1036 + $0x4] sm:$0xf]
    %v1039 = vld [vmem:[%s1036 + $0x8] sm:$0xf]
    %v1040 = vld [vmem:[%s1036 + $0xc] sm:$0xf]
    %v1041 = vpack.c.bf16 %v1032, %v1032
    %v1042 = vpack.c.bf16 %v1033, %v1033
    %v1043 = vpack.c.bf16 %v1034, %v1034
    %v1044 = vpack.c.bf16 %v1035, %v1035
    %v1049 = vunpack.c.l.b16 %v1037
    %v1050 = vunpack.c.l.b16 %v1038
    %v1051 = vunpack.c.l.b16 %v1039
    %v1052 = vunpack.c.l.b16 %v1040
    %v1053 = vpack.c.b16 %v1050, %v1049
    %v1054 = vpack.c.b16 %v1052, %v1051
    %v1056 = vsel %vm176, %v1053, 0
    %v1059 = vsel %vm176, %v1054, 0
    %v1062 = vand.u32 %v1041, %v186
    %v1065 = vand.u32 %v1042, %v186
    %v1068 = vand.u32 %v1043, %v186
    %v1071 = vand.u32 %v1044, %v186
    %1073 = vmatprep.subr.bf16.mxu0 %v1065
    %1074 = vmatpush1.bf16.msra.mxu0 %v1062
    %1075 = vmatprep.subr.bf16.mxu0 0
    %1076 = vmatpush1.bf16.msra.mxu0 0
    %1077 = vmatprep.subr.bf16.mxu0 0
    %1078 = vmatpush1.bf16.msra.mxu0 0
    %1079 = vmatprep.subr.bf16.mxu0 0
    %1080 = vmatpush1.bf16.msra.mxu0 0
    %1081 = vmatprep.subr.bf16.mxu0 0
    %1082 = vmatpush1.bf16.msra.mxu0 0
    %1083 = vmatprep.subr.bf16.mxu0 0
    %1084 = vmatpush1.bf16.msra.mxu0 0
    %1085 = vmatprep.subr.bf16.mxu0 0
    %1086 = vmatpush1.bf16.msra.mxu0 0
    %1087 = vmatprep.subr.bf16.mxu0 0
    %1088 = vmatpush1.bf16.msra.mxu0 0
    %1089 = vmatprep.subr.bf16.mxu0 0
    %1090 = vmatpush1.bf16.msra.mxu0 0
    %1091 = vmatprep.subr.bf16.mxu0 0
    %1092 = vmatpush1.bf16.msra.mxu0 0
    %1093 = vmatprep.subr.bf16.mxu0 0
    %1094 = vmatpush1.bf16.msra.mxu0 0
    %1095 = vmatprep.subr.bf16.mxu0 0
    %1096 = vmatpush1.bf16.msra.mxu0 0
    %1097 = vmatprep.subr.bf16.mxu0 0
    %1098 = vmatpush1.bf16.msra.mxu0 0
    %1099 = vmatprep.subr.bf16.mxu0 0
    %1100 = vmatpush1.bf16.msra.mxu0 0
    %1101 = vmatprep.subr.bf16.mxu0 0
    %1102 = vmatpush1.bf16.msra.mxu0 0
    %1103 = vmatprep.subr.bf16.mxu0 0
    %1104 = vmatpush1.bf16.msra.mxu0 0
    %1105 = vmatprep.mubr.bf16.mxu0 0
    %1106 = vmatmul.mubr.bf16.gmra.mrb[0].mxu0 %v1056
    %v1107 = vpop.f32.mrb[0].mxu0
    %v1108 = vadd.f32 0.0, %v1107
    %v1109 = vpop.f32.mrb[0].mxu0
    %v1110 = vadd.f32 0.0, %v1109
    %v1111 = vpop.f32.mrb[0].mxu0
    %v1112 = vadd.f32 0.0, %v1111
    %v1113 = vpop.f32.mrb[0].mxu0
    %v1114 = vadd.f32 0.0, %v1113
    %1115 = vmatprep.mubr.bf16.mxu0 0
    %1116 = vmatmul.mubr.bf16.gmra.mrb[0].mxu0 %v1059
    %v1117 = vpop.f32.mrb[0].mxu0
    %v1118 = vadd.f32 0.0, %v1117
    %v1119 = vpop.f32.mrb[0].mxu0
    %v1120 = vadd.f32 0.0, %v1119
    %v1121 = vpop.f32.mrb[0].mxu0
    %v1122 = vadd.f32 0.0, %v1121
    %v1123 = vpop.f32.mrb[0].mxu0
    %v1124 = vadd.f32 0.0, %v1123
    %1125 = vdwg.mxu0
    %1126 = vmatprep.subr.bf16.mxu0 %v1071
    %1127 = vmatpush1.bf16.msra.mxu0 %v1068
    %1128 = vmatprep.subr.bf16.mxu0 0
    %1129 = vmatpush1.bf16.msra.mxu0 0
    %1130 = vmatprep.subr.bf16.mxu0 0
    %1131 = vmatpush1.bf16.msra.mxu0 0
    %1132 = vmatprep.subr.bf16.mxu0 0
    %1133 = vmatpush1.bf16.msra.mxu0 0
    %1134 = vmatprep.subr.bf16.mxu0 0
    %1135 = vmatpush1.bf16.msra.mxu0 0
    %1136 = vmatprep.subr.bf16.mxu0 0
    %1137 = vmatpush1.bf16.msra.mxu0 0
    %1138 = vmatprep.subr.bf16.mxu0 0
    %1139 = vmatpush1.bf16.msra.mxu0 0
    %1140 = vmatprep.subr.bf16.mxu0 0
    %1141 = vmatpush1.bf16.msra.mxu0 0
    %1142 = vmatprep.subr.bf16.mxu0 0
    %1143 = vmatpush1.bf16.msra.mxu0 0
    %1144 = vmatprep.subr.bf16.mxu0 0
    %1145 = vmatpush1.bf16.msra.mxu0 0
    %1146 = vmatprep.subr.bf16.mxu0 0
    %1147 = vmatpush1.bf16.msra.mxu0 0
    %1148 = vmatprep.subr.bf16.mxu0 0
    %1149 = vmatpush1.bf16.msra.mxu0 0
    %1150 = vmatprep.subr.bf16.mxu0 0
    %1151 = vmatpush1.bf16.msra.mxu0 0
    %1152 = vmatprep.subr.bf16.mxu0 0
    %1153 = vmatpush1.bf16.msra.mxu0 0
    %1154 = vmatprep.subr.bf16.mxu0 0
    %1155 = vmatpush1.bf16.msra.mxu0 0
    %1156 = vmatprep.subr.bf16.mxu0 0
    %1157 = vmatpush1.bf16.msra.mxu0 0
    %1158 = vmatprep.mubr.bf16.mxu0 0
    %1159 = vmatmul.mubr.bf16.gmra.mrb[0].mxu0 %v1056
    %v1160 = vpop.f32.mrb[0].mxu0
    %v1161 = vadd.f32 0.0, %v1160
    %v1162 = vpop.f32.mrb[0].mxu0
    %v1163 = vadd.f32 0.0, %v1162
    %v1164 = vpop.f32.mrb[0].mxu0
    %v1165 = vadd.f32 0.0, %v1164
    %v1166 = vpop.f32.mrb[0].mxu0
    %v1167 = vadd.f32 0.0, %v1166
    %1168 = vmatprep.mubr.bf16.mxu0 0
    %1169 = vmatmul.mubr.bf16.gmra.mrb[0].mxu0 %v1059
    %v1170 = vpop.f32.mrb[0].mxu0
    %v1171 = vadd.f32 0.0, %v1170
    %v1172 = vpop.f32.mrb[0].mxu0
    %v1173 = vadd.f32 0.0, %v1172
    %v1174 = vpop.f32.mrb[0].mxu0
    %v1175 = vadd.f32 0.0, %v1174
    %v1176 = vpop.f32.mrb[0].mxu0
    %v1177 = vadd.f32 0.0, %v1176
    %1178 = vdwg.mxu0
    %v1179 = vadd.f32 %v980, %v1108
    %v1180 = vadd.f32 %v981, %v1110
    %v1181 = vadd.f32 %v982, %v1161
    %v1182 = vadd.f32 %v983, %v1163
    %v1183 = vadd.f32 %v984, %v1112
    %v1184 = vadd.f32 %v985, %v1114
    %v1185 = vadd.f32 %v986, %v1165
    %v1186 = vadd.f32 %v987, %v1167
    %v1187 = vadd.f32 %v988, %v1118
    %v1188 = vadd.f32 %v989, %v1120
    %v1189 = vadd.f32 %v990, %v1171
    %v1190 = vadd.f32 %v991, %v1173
    %v1191 = vadd.f32 %v992, %v1122
    %v1192 = vadd.f32 %v993, %v1124
    %v1193 = vadd.f32 %v994, %v1175
    %v1194 = vadd.f32 %v995, %v1177
    %1195 = vrot.lane.b32.xlu0 %v60, 113
    %v1196 = vpop.permute.xlu0 %1195
    %1197 = vrot.lane.b32.xlu0 %v64, 113
    %v1198 = vpop.permute.xlu0 %1197
    %1199 = vrot.lane.b32.xlu0 %v61, 113
    %v1200 = vpop.permute.xlu0 %1199
    %1201 = vrot.lane.b32.xlu0 %v65, 113
    %v1202 = vpop.permute.xlu0 %1201
    %vm1203 = vcmp.lt.s32.totalorder %v77, 113
    %v1204 = vsel %vm1203, %v1200, %v1202
    %v1205 = vsel %vm1203, %v1198, %v1200
    %v1206 = vsel %vm1203, %v1196, %v1198
    %v1207 = vsel %vm1203, %v1202, %v1196
    %s1208 = scalar_lea.vmem %s2, 24
    %v1209 = vld [vmem:[%s1208] sm:$0xf]
    %v1211 = vlaneseq
    %v1212 = vshrl.u32 %v1211, 7
    %v1213 = vsub.s32 0, %v1212
    %v1214 = vrot.slane %v1209, %v1213
    %v1215 = vlaneseq
    %v1216 = vshrl.u32 %v1215, 7
    %v1217 = vsub.s32 1, %v1216
    %v1218 = vrot.slane %v1209, %v1217
    %v1219 = vlaneseq
    %v1220 = vshrl.u32 %v1219, 7
    %v1221 = vsub.s32 2, %v1220
    %v1222 = vrot.slane %v1209, %v1221
    %v1223 = vlaneseq
    %v1224 = vshrl.u32 %v1223, 7
    %v1225 = vsub.s32 3, %v1224
    %v1226 = vrot.slane %v1209, %v1225
    %v1231 = vmul.f32 %v1206, %v1214
    %v1232 = vmul.f32 %v1205, %v1218
    %v1233 = vmul.f32 %v1204, %v1222
    %v1234 = vmul.f32 %v1207, %v1226
    %s1235 = scalar_lea.vmem %s3, 96
    %v1236 = vld [vmem:[%s1235] sm:$0xf]
    %v1237 = vld [vmem:[%s1235 + $0x4] sm:$0xf]
    %v1238 = vld [vmem:[%s1235 + $0x8] sm:$0xf]
    %v1239 = vld [vmem:[%s1235 + $0xc] sm:$0xf]
    %v1240 = vpack.c.bf16 %v1231, %v1231
    %v1241 = vpack.c.bf16 %v1232, %v1232
    %v1242 = vpack.c.bf16 %v1233, %v1233
    %v1243 = vpack.c.bf16 %v1234, %v1234
    %v1248 = vunpack.c.l.b16 %v1236
    %v1249 = vunpack.c.l.b16 %v1237
    %v1250 = vunpack.c.l.b16 %v1238
    %v1251 = vunpack.c.l.b16 %v1239
    %v1252 = vpack.c.b16 %v1249, %v1248
    %v1253 = vpack.c.b16 %v1251, %v1250
    %v1255 = vsel %vm176, %v1252, 0
    %v1258 = vsel %vm176, %v1253, 0
    %v1261 = vand.u32 %v1240, %v186
    %v1264 = vand.u32 %v1241, %v186
    %v1267 = vand.u32 %v1242, %v186
    %v1270 = vand.u32 %v1243, %v186
    %1272 = vmatprep.subr.bf16.mxu0 %v1264
    %1273 = vmatpush1.bf16.msra.mxu0 %v1261
    %1274 = vmatprep.subr.bf16.mxu0 0
    %1275 = vmatpush1.bf16.msra.mxu0 0
    %1276 = vmatprep.subr.bf16.mxu0 0
    %1277 = vmatpush1.bf16.msra.mxu0 0
    %1278 = vmatprep.subr.bf16.mxu0 0
    %1279 = vmatpush1.bf16.msra.mxu0 0
    %1280 = vmatprep.subr.bf16.mxu0 0
    %1281 = vmatpush1.bf16.msra.mxu0 0
    %1282 = vmatprep.subr.bf16.mxu0 0
    %1283 = vmatpush1.bf16.msra.mxu0 0
    %1284 = vmatprep.subr.bf16.mxu0 0
    %1285 = vmatpush1.bf16.msra.mxu0 0
    %1286 = vmatprep.subr.bf16.mxu0 0
    %1287 = vmatpush1.bf16.msra.mxu0 0
    %1288 = vmatprep.subr.bf16.mxu0 0
    %1289 = vmatpush1.bf16.msra.mxu0 0
    %1290 = vmatprep.subr.bf16.mxu0 0
    %1291 = vmatpush1.bf16.msra.mxu0 0
    %1292 = vmatprep.subr.bf16.mxu0 0
    %1293 = vmatpush1.bf16.msra.mxu0 0
    %1294 = vmatprep.subr.bf16.mxu0 0
    %1295 = vmatpush1.bf16.msra.mxu0 0
    %1296 = vmatprep.subr.bf16.mxu0 0
    %1297 = vmatpush1.bf16.msra.mxu0 0
    %1298 = vmatprep.subr.bf16.mxu0 0
    %1299 = vmatpush1.bf16.msra.mxu0 0
    %1300 = vmatprep.subr.bf16.mxu0 0
    %1301 = vmatpush1.bf16.msra.mxu0 0
    %1302 = vmatprep.subr.bf16.mxu0 0
    %1303 = vmatpush1.bf16.msra.mxu0 0
    %1304 = vmatprep.mubr.bf16.mxu0 0
    %1305 = vmatmul.mubr.bf16.gmra.mrb[0].mxu0 %v1255
    %v1306 = vpop.f32.mrb[0].mxu0
    %v1307 = vadd.f32 0.0, %v1306
    %v1308 = vpop.f32.mrb[0].mxu0
    %v1309 = vadd.f32 0.0, %v1308
    %v1310 = vpop.f32.mrb[0].mxu0
    %v1311 = vadd.f32 0.0, %v1310
    %v1312 = vpop.f32.mrb[0].mxu0
    %v1313 = vadd.f32 0.0, %v1312
    %1314 = vmatprep.mubr.bf16.mxu0 0
    %1315 = vmatmul.mubr.bf16.gmra.mrb[0].mxu0 %v1258
    %v1316 = vpop.f32.mrb[0].mxu0
    %v1317 = vadd.f32 0.0, %v1316
    %v1318 = vpop.f32.mrb[0].mxu0
    %v1319 = vadd.f32 0.0, %v1318
    %v1320 = vpop.f32.mrb[0].mxu0
    %v1321 = vadd.f32 0.0, %v1320
    %v1322 = vpop.f32.mrb[0].mxu0
    %v1323 = vadd.f32 0.0, %v1322
    %1324 = vdwg.mxu0
    %1325 = vmatprep.subr.bf16.mxu0 %v1270
    %1326 = vmatpush1.bf16.msra.mxu0 %v1267
    %1327 = vmatprep.subr.bf16.mxu0 0
    %1328 = vmatpush1.bf16.msra.mxu0 0
    %1329 = vmatprep.subr.bf16.mxu0 0
    %1330 = vmatpush1.bf16.msra.mxu0 0
    %1331 = vmatprep.subr.bf16.mxu0 0
    %1332 = vmatpush1.bf16.msra.mxu0 0
    %1333 = vmatprep.subr.bf16.mxu0 0
    %1334 = vmatpush1.bf16.msra.mxu0 0
    %1335 = vmatprep.subr.bf16.mxu0 0
    %1336 = vmatpush1.bf16.msra.mxu0 0
    %1337 = vmatprep.subr.bf16.mxu0 0
    %1338 = vmatpush1.bf16.msra.mxu0 0
    %1339 = vmatprep.subr.bf16.mxu0 0
    %1340 = vmatpush1.bf16.msra.mxu0 0
    %1341 = vmatprep.subr.bf16.mxu0 0
    %1342 = vmatpush1.bf16.msra.mxu0 0
    %1343 = vmatprep.subr.bf16.mxu0 0
    %1344 = vmatpush1.bf16.msra.mxu0 0
    %1345 = vmatprep.subr.bf16.mxu0 0
    %1346 = vmatpush1.bf16.msra.mxu0 0
    %1347 = vmatprep.subr.bf16.mxu0 0
    %1348 = vmatpush1.bf16.msra.mxu0 0
    %1349 = vmatprep.subr.bf16.mxu0 0
    %1350 = vmatpush1.bf16.msra.mxu0 0
    %1351 = vmatprep.subr.bf16.mxu0 0
    %1352 = vmatpush1.bf16.msra.mxu0 0
    %1353 = vmatprep.subr.bf16.mxu0 0
    %1354 = vmatpush1.bf16.msra.mxu0 0
    %1355 = vmatprep.subr.bf16.mxu0 0
    %1356 = vmatpush1.bf16.msra.mxu0 0
    %1357 = vmatprep.mubr.bf16.mxu0 0
    %1358 = vmatmul.mubr.bf16.gmra.mrb[0].mxu0 %v1255
    %v1359 = vpop.f32.mrb[0].mxu0
    %v1360 = vadd.f32 0.0, %v1359
    %v1361 = vpop.f32.mrb[0].mxu0
    %v1362 = vadd.f32 0.0, %v1361
    %v1363 = vpop.f32.mrb[0].mxu0
    %v1364 = vadd.f32 0.0, %v1363
    %v1365 = vpop.f32.mrb[0].mxu0
    %v1366 = vadd.f32 0.0, %v1365
    %1367 = vmatprep.mubr.bf16.mxu0 0
    %1368 = vmatmul.mubr.bf16.gmra.mrb[0].mxu0 %v1258
    %v1369 = vpop.f32.mrb[0].mxu0
    %v1370 = vadd.f32 0.0, %v1369
    %v1371 = vpop.f32.mrb[0].mxu0
    %v1372 = vadd.f32 0.0, %v1371
    %v1373 = vpop.f32.mrb[0].mxu0
    %v1374 = vadd.f32 0.0, %v1373
    %v1375 = vpop.f32.mrb[0].mxu0
    %v1376 = vadd.f32 0.0, %v1375
    %1377 = vdwg.mxu0
    %v1378 = vadd.f32 %v1179, %v1307
    %v1379 = vadd.f32 %v1180, %v1309
    %v1380 = vadd.f32 %v1181, %v1360
    %v1381 = vadd.f32 %v1182, %v1362
    %v1382 = vadd.f32 %v1183, %v1311
    %v1383 = vadd.f32 %v1184, %v1313
    %v1384 = vadd.f32 %v1185, %v1364
    %v1385 = vadd.f32 %v1186, %v1366
    %v1386 = vadd.f32 %v1187, %v1317
    %v1387 = vadd.f32 %v1188, %v1319
    %v1388 = vadd.f32 %v1189, %v1370
    %v1389 = vadd.f32 %v1190, %v1372
    %v1390 = vadd.f32 %v1191, %v1321
    %v1391 = vadd.f32 %v1192, %v1323
    %v1392 = vadd.f32 %v1193, %v1374
    %v1393 = vadd.f32 %v1194, %v1376
    %1394 = vrot.lane.b32.xlu0 %v60, 112
    %v1395 = vpop.permute.xlu0 %1394
    %1396 = vrot.lane.b32.xlu0 %v64, 112
    %v1397 = vpop.permute.xlu0 %1396
    %1398 = vrot.lane.b32.xlu0 %v61, 112
    %v1399 = vpop.permute.xlu0 %1398
    %1400 = vrot.lane.b32.xlu0 %v65, 112
    %v1401 = vpop.permute.xlu0 %1400
    %vm1402 = vcmp.lt.s32.totalorder %v77, 112
    %v1403 = vsel %vm1402, %v1399, %v1401
    %v1404 = vsel %vm1402, %v1397, %v1399
    %v1405 = vsel %vm1402, %v1395, %v1397
    %v1406 = vsel %vm1402, %v1401, %v1395
    %s1407 = scalar_lea.vmem %s2, 28
    %v1408 = vld [vmem:[%s1407] sm:$0xf]
    %v1410 = vlaneseq
    %v1411 = vshrl.u32 %v1410, 7
    %v1412 = vsub.s32 0, %v1411
    %v1413 = vrot.slane %v1408, %v1412
    %v1414 = vlaneseq
    %v1415 = vshrl.u32 %v1414, 7
    %v1416 = vsub.s32 1, %v1415
    %v1417 = vrot.slane %v1408, %v1416
    %v1418 = vlaneseq
    %v1419 = vshrl.u32 %v1418, 7
    %v1420 = vsub.s32 2, %v1419
    %v1421 = vrot.slane %v1408, %v1420
    %v1422 = vlaneseq
    %v1423 = vshrl.u32 %v1422, 7
    %v1424 = vsub.s32 3, %v1423
    %v1425 = vrot.slane %v1408, %v1424
    %v1430 = vmul.f32 %v1405, %v1413
    %v1431 = vmul.f32 %v1404, %v1417
    %v1432 = vmul.f32 %v1403, %v1421
    %v1433 = vmul.f32 %v1406, %v1425
    %s1434 = scalar_lea.vmem %s3, 112
    %v1435 = vld [vmem:[%s1434] sm:$0xf]
    %v1436 = vld [vmem:[%s1434 + $0x4] sm:$0xf]
    %v1437 = vld [vmem:[%s1434 + $0x8] sm:$0xf]
    %v1438 = vld [vmem:[%s1434 + $0xc] sm:$0xf]
    %v1439 = vpack.c.bf16 %v1430, %v1430
    %v1440 = vpack.c.bf16 %v1431, %v1431
    %v1441 = vpack.c.bf16 %v1432, %v1432
    %v1442 = vpack.c.bf16 %v1433, %v1433
    %v1447 = vunpack.c.l.b16 %v1435
    %v1448 = vunpack.c.l.b16 %v1436
    %v1449 = vunpack.c.l.b16 %v1437
    %v1450 = vunpack.c.l.b16 %v1438
    %v1451 = vpack.c.b16 %v1448, %v1447
    %v1452 = vpack.c.b16 %v1450, %v1449
    %v1454 = vsel %vm176, %v1451, 0
    %v1457 = vsel %vm176, %v1452, 0
    %v1460 = vand.u32 %v1439, %v186
    %v1463 = vand.u32 %v1440, %v186
    %v1466 = vand.u32 %v1441, %v186
    %v1469 = vand.u32 %v1442, %v186
    %1471 = vmatprep.subr.bf16.mxu0 %v1463
    %1472 = vmatpush1.bf16.msra.mxu0 %v1460
    %1473 = vmatprep.subr.bf16.mxu0 0
    %1474 = vmatpush1.bf16.msra.mxu0 0
    %1475 = vmatprep.subr.bf16.mxu0 0
    %1476 = vmatpush1.bf16.msra.mxu0 0
    %1477 = vmatprep.subr.bf16.mxu0 0
    %1478 = vmatpush1.bf16.msra.mxu0 0
    %1479 = vmatprep.subr.bf16.mxu0 0
    %1480 = vmatpush1.bf16.msra.mxu0 0
    %1481 = vmatprep.subr.bf16.mxu0 0
    %1482 = vmatpush1.bf16.msra.mxu0 0
    %1483 = vmatprep.subr.bf16.mxu0 0
    %1484 = vmatpush1.bf16.msra.mxu0 0
    %1485 = vmatprep.subr.bf16.mxu0 0
    %1486 = vmatpush1.bf16.msra.mxu0 0
    %1487 = vmatprep.subr.bf16.mxu0 0
    %1488 = vmatpush1.bf16.msra.mxu0 0
    %1489 = vmatprep.subr.bf16.mxu0 0
    %1490 = vmatpush1.bf16.msra.mxu0 0
    %1491 = vmatprep.subr.bf16.mxu0 0
    %1492 = vmatpush1.bf16.msra.mxu0 0
    %1493 = vmatprep.subr.bf16.mxu0 0
    %1494 = vmatpush1.bf16.msra.mxu0 0
    %1495 = vmatprep.subr.bf16.mxu0 0
    %1496 = vmatpush1.bf16.msra.mxu0 0
    %1497 = vmatprep.subr.bf16.mxu0 0
    %1498 = vmatpush1.bf16.msra.mxu0 0
    %1499 = vmatprep.subr.bf16.mxu0 0
    %1500 = vmatpush1.bf16.msra.mxu0 0
    %1501 = vmatprep.subr.bf16.mxu0 0
    %1502 = vmatpush1.bf16.msra.mxu0 0
    %1503 = vmatprep.mubr.bf16.mxu0 0
    %1504 = vmatmul.mubr.bf16.gmra.mrb[0].mxu0 %v1454
    %v1505 = vpop.f32.mrb[0].mxu0
    %v1506 = vadd.f32 0.0, %v1505
    %v1507 = vpop.f32.mrb[0].mxu0
    %v1508 = vadd.f32 0.0, %v1507
    %v1509 = vpop.f32.mrb[0].mxu0
    %v1510 = vadd.f32 0.0, %v1509
    %v1511 = vpop.f32.mrb[0].mxu0
    %v1512 = vadd.f32 0.0, %v1511
    %1513 = vmatprep.mubr.bf16.mxu0 0
    %1514 = vmatmul.mubr.bf16.gmra.mrb[0].mxu0 %v1457
    %v1515 = vpop.f32.mrb[0].mxu0
    %v1516 = vadd.f32 0.0, %v1515
    %v1517 = vpop.f32.mrb[0].mxu0
    %v1518 = vadd.f32 0.0, %v1517
    %v1519 = vpop.f32.mrb[0].mxu0
    %v1520 = vadd.f32 0.0, %v1519
    %v1521 = vpop.f32.mrb[0].mxu0
    %v1522 = vadd.f32 0.0, %v1521
    %1523 = vdwg.mxu0
    %1524 = vmatprep.subr.bf16.mxu0 %v1469
    %1525 = vmatpush1.bf16.msra.mxu0 %v1466
    %1526 = vmatprep.subr.bf16.mxu0 0
    %1527 = vmatpush1.bf16.msra.mxu0 0
    %1528 = vmatprep.subr.bf16.mxu0 0
    %1529 = vmatpush1.bf16.msra.mxu0 0
    %1530 = vmatprep.subr.bf16.mxu0 0
    %1531 = vmatpush1.bf16.msra.mxu0 0
    %1532 = vmatprep.subr.bf16.mxu0 0
    %1533 = vmatpush1.bf16.msra.mxu0 0
    %1534 = vmatprep.subr.bf16.mxu0 0
    %1535 = vmatpush1.bf16.msra.mxu0 0
    %1536 = vmatprep.subr.bf16.mxu0 0
    %1537 = vmatpush1.bf16.msra.mxu0 0
    %1538 = vmatprep.subr.bf16.mxu0 0
    %1539 = vmatpush1.bf16.msra.mxu0 0
    %1540 = vmatprep.subr.bf16.mxu0 0
    %1541 = vmatpush1.bf16.msra.mxu0 0
    %1542 = vmatprep.subr.bf16.mxu0 0
    %1543 = vmatpush1.bf16.msra.mxu0 0
    %1544 = vmatprep.subr.bf16.mxu0 0
    %1545 = vmatpush1.bf16.msra.mxu0 0
    %1546 = vmatprep.subr.bf16.mxu0 0
    %1547 = vmatpush1.bf16.msra.mxu0 0
    %1548 = vmatprep.subr.bf16.mxu0 0
    %1549 = vmatpush1.bf16.msra.mxu0 0
    %1550 = vmatprep.subr.bf16.mxu0 0
    %1551 = vmatpush1.bf16.msra.mxu0 0
    %1552 = vmatprep.subr.bf16.mxu0 0
    %1553 = vmatpush1.bf16.msra.mxu0 0
    %1554 = vmatprep.subr.bf16.mxu0 0
    %1555 = vmatpush1.bf16.msra.mxu0 0
    %1556 = vmatprep.mubr.bf16.mxu0 0
    %1557 = vmatmul.mubr.bf16.gmra.mrb[0].mxu0 %v1454
    %v1558 = vpop.f32.mrb[0].mxu0
    %v1559 = vadd.f32 0.0, %v1558
    %v1560 = vpop.f32.mrb[0].mxu0
    %v1561 = vadd.f32 0.0, %v1560
    %v1562 = vpop.f32.mrb[0].mxu0
    %v1563 = vadd.f32 0.0, %v1562
    %v1564 = vpop.f32.mrb[0].mxu0
    %v1565 = vadd.f32 0.0, %v1564
    %1566 = vmatprep.mubr.bf16.mxu0 0
    %1567 = vmatmul.mubr.bf16.gmra.mrb[0].mxu0 %v1457
    %v1568 = vpop.f32.mrb[0].mxu0
    %v1569 = vadd.f32 0.0, %v1568
    %v1570 = vpop.f32.mrb[0].mxu0
    %v1571 = vadd.f32 0.0, %v1570
    %v1572 = vpop.f32.mrb[0].mxu0
    %v1573 = vadd.f32 0.0, %v1572
    %v1574 = vpop.f32.mrb[0].mxu0
    %v1575 = vadd.f32 0.0, %v1574
    %1576 = vdwg.mxu0
    %v1577 = vadd.f32 %v1378, %v1506
    %v1578 = vadd.f32 %v1379, %v1508
    %v1579 = vadd.f32 %v1380, %v1559
    %v1580 = vadd.f32 %v1381, %v1561
    %v1581 = vadd.f32 %v1382, %v1510
    %v1582 = vadd.f32 %v1383, %v1512
    %v1583 = vadd.f32 %v1384, %v1563
    %v1584 = vadd.f32 %v1385, %v1565
    %v1585 = vadd.f32 %v1386, %v1516
    %v1586 = vadd.f32 %v1387, %v1518
    %v1587 = vadd.f32 %v1388, %v1569
    %v1588 = vadd.f32 %v1389, %v1571
    %v1589 = vadd.f32 %v1390, %v1520
    %v1590 = vadd.f32 %v1391, %v1522
    %v1591 = vadd.f32 %v1392, %v1573
    %v1592 = vadd.f32 %v1393, %v1575
    %1593 = vrot.lane.b32.xlu0 %v60, 111
    %v1594 = vpop.permute.xlu0 %1593
    %1595 = vrot.lane.b32.xlu0 %v64, 111
    %v1596 = vpop.permute.xlu0 %1595
    %1597 = vrot.lane.b32.xlu0 %v61, 111
    %v1598 = vpop.permute.xlu0 %1597
    %1599 = vrot.lane.b32.xlu0 %v65, 111
    %v1600 = vpop.permute.xlu0 %1599
    %vm1601 = vcmp.lt.s32.totalorder %v77, 111
    %v1602 = vsel %vm1601, %v1598, %v1600
    %v1603 = vsel %vm1601, %v1596, %v1598
    %v1604 = vsel %vm1601, %v1594, %v1596
    %v1605 = vsel %vm1601, %v1600, %v1594
    %s1606 = scalar_lea.vmem %s2, 32
    %v1607 = vld [vmem:[%s1606] sm:$0xf]
    %v1609 = vlaneseq
    %v1610 = vshrl.u32 %v1609, 7
    %v1611 = vsub.s32 0, %v1610
    %v1612 = vrot.slane %v1607, %v1611
    %v1613 = vlaneseq
    %v1614 = vshrl.u32 %v1613, 7
    %v1615 = vsub.s32 1, %v1614
    %v1616 = vrot.slane %v1607, %v1615
    %v1617 = vlaneseq
    %v1618 = vshrl.u32 %v1617, 7
    %v1619 = vsub.s32 2, %v1618
    %v1620 = vrot.slane %v1607, %v1619
    %v1621 = vlaneseq
    %v1622 = vshrl.u32 %v1621, 7
    %v1623 = vsub.s32 3, %v1622
    %v1624 = vrot.slane %v1607, %v1623
    %v1629 = vmul.f32 %v1604, %v1612
    %v1630 = vmul.f32 %v1603, %v1616
    %v1631 = vmul.f32 %v1602, %v1620
    %v1632 = vmul.f32 %v1605, %v1624
    %s1633 = scalar_lea.vmem %s3, 128
    %v1634 = vld [vmem:[%s1633] sm:$0xf]
    %v1635 = vld [vmem:[%s1633 + $0x4] sm:$0xf]
    %v1636 = vld [vmem:[%s1633 + $0x8] sm:$0xf]
    %v1637 = vld [vmem:[%s1633 + $0xc] sm:$0xf]
    %v1638 = vpack.c.bf16 %v1629, %v1629
    %v1639 = vpack.c.bf16 %v1630, %v1630
    %v1640 = vpack.c.bf16 %v1631, %v1631
    %v1641 = vpack.c.bf16 %v1632, %v1632
    %v1646 = vunpack.c.l.b16 %v1634
    %v1647 = vunpack.c.l.b16 %v1635
    %v1648 = vunpack.c.l.b16 %v1636
    %v1649 = vunpack.c.l.b16 %v1637
    %v1650 = vpack.c.b16 %v1647, %v1646
    %v1651 = vpack.c.b16 %v1649, %v1648
    %v1653 = vsel %vm176, %v1650, 0
    %v1656 = vsel %vm176, %v1651, 0
    %v1659 = vand.u32 %v1638, %v186
    %v1662 = vand.u32 %v1639, %v186
    %v1665 = vand.u32 %v1640, %v186
    %v1668 = vand.u32 %v1641, %v186
    %1670 = vmatprep.subr.bf16.mxu0 %v1662
    %1671 = vmatpush1.bf16.msra.mxu0 %v1659
    %1672 = vmatprep.subr.bf16.mxu0 0
    %1673 = vmatpush1.bf16.msra.mxu0 0
    %1674 = vmatprep.subr.bf16.mxu0 0
    %1675 = vmatpush1.bf16.msra.mxu0 0
    %1676 = vmatprep.subr.bf16.mxu0 0
    %1677 = vmatpush1.bf16.msra.mxu0 0
    %1678 = vmatprep.subr.bf16.mxu0 0
    %1679 = vmatpush1.bf16.msra.mxu0 0
    %1680 = vmatprep.subr.bf16.mxu0 0
    %1681 = vmatpush1.bf16.msra.mxu0 0
    %1682 = vmatprep.subr.bf16.mxu0 0
    %1683 = vmatpush1.bf16.msra.mxu0 0
    %1684 = vmatprep.subr.bf16.mxu0 0
    %1685 = vmatpush1.bf16.msra.mxu0 0
    %1686 = vmatprep.subr.bf16.mxu0 0
    %1687 = vmatpush1.bf16.msra.mxu0 0
    %1688 = vmatprep.subr.bf16.mxu0 0
    %1689 = vmatpush1.bf16.msra.mxu0 0
    %1690 = vmatprep.subr.bf16.mxu0 0
    %1691 = vmatpush1.bf16.msra.mxu0 0
    %1692 = vmatprep.subr.bf16.mxu0 0
    %1693 = vmatpush1.bf16.msra.mxu0 0
    %1694 = vmatprep.subr.bf16.mxu0 0
    %1695 = vmatpush1.bf16.msra.mxu0 0
    %1696 = vmatprep.subr.bf16.mxu0 0
    %1697 = vmatpush1.bf16.msra.mxu0 0
    %1698 = vmatprep.subr.bf16.mxu0 0
    %1699 = vmatpush1.bf16.msra.mxu0 0
    %1700 = vmatprep.subr.bf16.mxu0 0
    %1701 = vmatpush1.bf16.msra.mxu0 0
    %1702 = vmatprep.mubr.bf16.mxu0 0
    %1703 = vmatmul.mubr.bf16.gmra.mrb[0].mxu0 %v1653
    %v1704 = vpop.f32.mrb[0].mxu0
    %v1705 = vadd.f32 0.0, %v1704
    %v1706 = vpop.f32.mrb[0].mxu0
    %v1707 = vadd.f32 0.0, %v1706
    %v1708 = vpop.f32.mrb[0].mxu0
    %v1709 = vadd.f32 0.0, %v1708
    %v1710 = vpop.f32.mrb[0].mxu0
    %v1711 = vadd.f32 0.0, %v1710
    %1712 = vmatprep.mubr.bf16.mxu0 0
    %1713 = vmatmul.mubr.bf16.gmra.mrb[0].mxu0 %v1656
    %v1714 = vpop.f32.mrb[0].mxu0
    %v1715 = vadd.f32 0.0, %v1714
    %v1716 = vpop.f32.mrb[0].mxu0
    %v1717 = vadd.f32 0.0, %v1716
    %v1718 = vpop.f32.mrb[0].mxu0
    %v1719 = vadd.f32 0.0, %v1718
    %v1720 = vpop.f32.mrb[0].mxu0
    %v1721 = vadd.f32 0.0, %v1720
    %1722 = vdwg.mxu0
    %1723 = vmatprep.subr.bf16.mxu0 %v1668
    %1724 = vmatpush1.bf16.msra.mxu0 %v1665
    %1725 = vmatprep.subr.bf16.mxu0 0
    %1726 = vmatpush1.bf16.msra.mxu0 0
    %1727 = vmatprep.subr.bf16.mxu0 0
    %1728 = vmatpush1.bf16.msra.mxu0 0
    %1729 = vmatprep.subr.bf16.mxu0 0
    %1730 = vmatpush1.bf16.msra.mxu0 0
    %1731 = vmatprep.subr.bf16.mxu0 0
    %1732 = vmatpush1.bf16.msra.mxu0 0
    %1733 = vmatprep.subr.bf16.mxu0 0
    %1734 = vmatpush1.bf16.msra.mxu0 0
    %1735 = vmatprep.subr.bf16.mxu0 0
    %1736 = vmatpush1.bf16.msra.mxu0 0
    %1737 = vmatprep.subr.bf16.mxu0 0
    %1738 = vmatpush1.bf16.msra.mxu0 0
    %1739 = vmatprep.subr.bf16.mxu0 0
    %1740 = vmatpush1.bf16.msra.mxu0 0
    %1741 = vmatprep.subr.bf16.mxu0 0
    %1742 = vmatpush1.bf16.msra.mxu0 0
    %1743 = vmatprep.subr.bf16.mxu0 0
    %1744 = vmatpush1.bf16.msra.mxu0 0
    %1745 = vmatprep.subr.bf16.mxu0 0
    %1746 = vmatpush1.bf16.msra.mxu0 0
    %1747 = vmatprep.subr.bf16.mxu0 0
    %1748 = vmatpush1.bf16.msra.mxu0 0
    %1749 = vmatprep.subr.bf16.mxu0 0
    %1750 = vmatpush1.bf16.msra.mxu0 0
    %1751 = vmatprep.subr.bf16.mxu0 0
    %1752 = vmatpush1.bf16.msra.mxu0 0
    %1753 = vmatprep.subr.bf16.mxu0 0
    %1754 = vmatpush1.bf16.msra.mxu0 0
    %1755 = vmatprep.mubr.bf16.mxu0 0
    %1756 = vmatmul.mubr.bf16.gmra.mrb[0].mxu0 %v1653
    %v1757 = vpop.f32.mrb[0].mxu0
    %v1758 = vadd.f32 0.0, %v1757
    %v1759 = vpop.f32.mrb[0].mxu0
    %v1760 = vadd.f32 0.0, %v1759
    %v1761 = vpop.f32.mrb[0].mxu0
    %v1762 = vadd.f32 0.0, %v1761
    %v1763 = vpop.f32.mrb[0].mxu0
    %v1764 = vadd.f32 0.0, %v1763
    %1765 = vmatprep.mubr.bf16.mxu0 0
    %1766 = vmatmul.mubr.bf16.gmra.mrb[0].mxu0 %v1656
    %v1767 = vpop.f32.mrb[0].mxu0
    %v1768 = vadd.f32 0.0, %v1767
    %v1769 = vpop.f32.mrb[0].mxu0
    %v1770 = vadd.f32 0.0, %v1769
    %v1771 = vpop.f32.mrb[0].mxu0
    %v1772 = vadd.f32 0.0, %v1771
    %v1773 = vpop.f32.mrb[0].mxu0
    %v1774 = vadd.f32 0.0, %v1773
    %1775 = vdwg.mxu0
    %v1776 = vadd.f32 %v1577, %v1705
    %v1777 = vadd.f32 %v1578, %v1707
    %v1778 = vadd.f32 %v1579, %v1758
    %v1779 = vadd.f32 %v1580, %v1760
    %v1780 = vadd.f32 %v1581, %v1709
    %v1781 = vadd.f32 %v1582, %v1711
    %v1782 = vadd.f32 %v1583, %v1762
    %v1783 = vadd.f32 %v1584, %v1764
    %v1784 = vadd.f32 %v1585, %v1715
    %v1785 = vadd.f32 %v1586, %v1717
    %v1786 = vadd.f32 %v1587, %v1768
    %v1787 = vadd.f32 %v1588, %v1770
    %v1788 = vadd.f32 %v1589, %v1719
    %v1789 = vadd.f32 %v1590, %v1721
    %v1790 = vadd.f32 %v1591, %v1772
    %v1791 = vadd.f32 %v1592, %v1774
    %v1792 = vld [vmem:[%s4] sm:$0xff]
    %v1793 = vld [vmem:[%s4 + $0x8] sm:$0xff]
    %v1794 = vld [vmem:[%s4 + $0x10] sm:$0xff]
    %v1795 = vld [vmem:[%s4 + $0x18] sm:$0xff]
    %1797 = vset.pattern.permute.xlu0 0
    %1798 = vperm.xlu0 %1797, %v1792
    %v1799 = vpop.permute.xlu0 %1798
    %1802 = vset.pattern.permute.xlu0 0
    %1803 = vperm.xlu0 %1802, %v1793
    %v1804 = vpop.permute.xlu0 %1803
    %1807 = vset.pattern.permute.xlu0 0
    %1808 = vperm.xlu0 %1807, %v1794
    %v1809 = vpop.permute.xlu0 %1808
    %1812 = vset.pattern.permute.xlu0 0
    %1813 = vperm.xlu0 %1812, %v1795
    %v1814 = vpop.permute.xlu0 %1813
    %v1816 = vadd.f32 %v1776, %v1799
    %v1817 = vadd.f32 %v1777, %v1799
    %v1818 = vadd.f32 %v1778, %v1799
    %v1819 = vadd.f32 %v1779, %v1799
    %v1820 = vadd.f32 %v1780, %v1804
    %v1821 = vadd.f32 %v1781, %v1804
    %v1822 = vadd.f32 %v1782, %v1804
    %v1823 = vadd.f32 %v1783, %v1804
    %v1824 = vadd.f32 %v1784, %v1809
    %v1825 = vadd.f32 %v1785, %v1809
    %v1826 = vadd.f32 %v1786, %v1809
    %v1827 = vadd.f32 %v1787, %v1809
    %v1828 = vadd.f32 %v1788, %v1814
    %v1829 = vadd.f32 %v1789, %v1814
    %v1830 = vadd.f32 %v1790, %v1814
    %v1831 = vadd.f32 %v1791, %v1814
    %v1832 = vmax.f32 %v1816, 0.0
    %v1833 = vmax.f32 %v1817, 0.0
    %v1834 = vmax.f32 %v1818, 0.0
    %v1835 = vmax.f32 %v1819, 0.0
    %v1836 = vmax.f32 %v1820, 0.0
    %v1837 = vmax.f32 %v1821, 0.0
    %v1838 = vmax.f32 %v1822, 0.0
    %v1839 = vmax.f32 %v1823, 0.0
    %v1840 = vmax.f32 %v1824, 0.0
    %v1841 = vmax.f32 %v1825, 0.0
    %v1842 = vmax.f32 %v1826, 0.0
    %v1843 = vmax.f32 %v1827, 0.0
    %v1844 = vmax.f32 %v1828, 0.0
    %v1845 = vmax.f32 %v1829, 0.0
    %v1846 = vmax.f32 %v1830, 0.0
    %v1847 = vmax.f32 %v1831, 0.0
    %v1848 = vld [vmem:[%s5] sm:$0xff]
    %v1849 = vld [vmem:[%s5 + $0x8] sm:$0xff]
    %v1850 = vld [vmem:[%s5 + $0x10] sm:$0xff]
    %v1851 = vld [vmem:[%s5 + $0x18] sm:$0xff]
    %v1852 = vld [vmem:[%s5 + $0x20] sm:$0xff]
    %v1853 = vld [vmem:[%s5 + $0x28] sm:$0xff]
    %v1854 = vld [vmem:[%s5 + $0x30] sm:$0xff]
    %v1855 = vld [vmem:[%s5 + $0x38] sm:$0xff]
    %v1856 = vld [vmem:[%s5 + $0x40] sm:$0xff]
    %v1857 = vld [vmem:[%s5 + $0x48] sm:$0xff]
    %v1858 = vld [vmem:[%s5 + $0x50] sm:$0xff]
    %v1859 = vld [vmem:[%s5 + $0x58] sm:$0xff]
    %v1860 = vld [vmem:[%s5 + $0x60] sm:$0xff]
    %v1861 = vld [vmem:[%s5 + $0x68] sm:$0xff]
    %v1862 = vld [vmem:[%s5 + $0x70] sm:$0xff]
    %v1863 = vld [vmem:[%s5 + $0x78] sm:$0xff]
    %v1864 = vld [vmem:[%s5 + $0x80] sm:$0xff]
    %v1865 = vld [vmem:[%s5 + $0x88] sm:$0xff]
    %v1866 = vld [vmem:[%s5 + $0x90] sm:$0xff]
    %v1867 = vld [vmem:[%s5 + $0x98] sm:$0xff]
    %v1868 = vld [vmem:[%s5 + $0xa0] sm:$0xff]
    %v1869 = vld [vmem:[%s5 + $0xa8] sm:$0xff]
    %v1870 = vld [vmem:[%s5 + $0xb0] sm:$0xff]
    %v1871 = vld [vmem:[%s5 + $0xb8] sm:$0xff]
    %v1872 = vld [vmem:[%s5 + $0xc0] sm:$0xff]
    %v1873 = vld [vmem:[%s5 + $0xc8] sm:$0xff]
    %v1874 = vld [vmem:[%s5 + $0xd0] sm:$0xff]
    %v1875 = vld [vmem:[%s5 + $0xd8] sm:$0xff]
    %v1876 = vld [vmem:[%s5 + $0xe0] sm:$0xff]
    %v1877 = vld [vmem:[%s5 + $0xe8] sm:$0xff]
    %v1878 = vld [vmem:[%s5 + $0xf0] sm:$0xff]
    %v1879 = vld [vmem:[%s5 + $0xf8] sm:$0xff]
    %v1880 = vld [vmem:[%s5 + $0x100] sm:$0xff]
    %v1881 = vld [vmem:[%s5 + $0x108] sm:$0xff]
    %v1882 = vld [vmem:[%s5 + $0x110] sm:$0xff]
    %v1883 = vld [vmem:[%s5 + $0x118] sm:$0xff]
    %v1884 = vld [vmem:[%s5 + $0x120] sm:$0xff]
    %v1885 = vld [vmem:[%s5 + $0x128] sm:$0xff]
    %v1886 = vld [vmem:[%s5 + $0x130] sm:$0xff]
    %v1887 = vld [vmem:[%s5 + $0x138] sm:$0xff]
    %v1888 = vld [vmem:[%s5 + $0x140] sm:$0xff]
    %v1889 = vld [vmem:[%s5 + $0x148] sm:$0xff]
    %v1890 = vld [vmem:[%s5 + $0x150] sm:$0xff]
    %v1891 = vld [vmem:[%s5 + $0x158] sm:$0xff]
    %v1892 = vld [vmem:[%s5 + $0x160] sm:$0xff]
    %v1893 = vld [vmem:[%s5 + $0x168] sm:$0xff]
    %v1894 = vld [vmem:[%s5 + $0x170] sm:$0xff]
    %v1895 = vld [vmem:[%s5 + $0x178] sm:$0xff]
    %v1896 = vld [vmem:[%s5 + $0x180] sm:$0xff]
    %v1897 = vld [vmem:[%s5 + $0x188] sm:$0xff]
    %v1898 = vld [vmem:[%s5 + $0x190] sm:$0xff]
    %v1899 = vld [vmem:[%s5 + $0x198] sm:$0xff]
    %v1900 = vld [vmem:[%s5 + $0x1a0] sm:$0xff]
    %v1901 = vld [vmem:[%s5 + $0x1a8] sm:$0xff]
    %v1902 = vld [vmem:[%s5 + $0x1b0] sm:$0xff]
    %v1903 = vld [vmem:[%s5 + $0x1b8] sm:$0xff]
    %v1904 = vld [vmem:[%s5 + $0x1c0] sm:$0xff]
    %v1905 = vld [vmem:[%s5 + $0x1c8] sm:$0xff]
    %v1906 = vld [vmem:[%s5 + $0x1d0] sm:$0xff]
    %v1907 = vld [vmem:[%s5 + $0x1d8] sm:$0xff]
    %v1908 = vld [vmem:[%s5 + $0x1e0] sm:$0xff]
    %v1909 = vld [vmem:[%s5 + $0x1e8] sm:$0xff]
    %v1910 = vld [vmem:[%s5 + $0x1f0] sm:$0xff]
    %v1911 = vld [vmem:[%s5 + $0x1f8] sm:$0xff]
    %1912 = vmatprep.subr.mxu0 0.0
    %1913 = vmatpush1.msra.mxu0 %v1848
    %1914 = vmatprep.subr.mxu0 0.0
    %1915 = vmatpush1.msra.mxu0 %v1849
    %1916 = vmatprep.subr.mxu0 0.0
    %1917 = vmatpush1.msra.mxu0 %v1850
    %1918 = vmatprep.subr.mxu0 0.0
    %1919 = vmatpush1.msra.mxu0 %v1851
    %1920 = vmatprep.subr.mxu0 0.0
    %1921 = vmatpush1.msra.mxu0 %v1852
    %1922 = vmatprep.subr.mxu0 0.0
    %1923 = vmatpush1.msra.mxu0 %v1853
    %1924 = vmatprep.subr.mxu0 0.0
    %1925 = vmatpush1.msra.mxu0 %v1854
    %1926 = vmatprep.subr.mxu0 0.0
    %1927 = vmatpush1.msra.mxu0 %v1855
    %1928 = vmatprep.subr.mxu0 0.0
    %1929 = vmatpush1.msra.mxu0 %v1856
    %1930 = vmatprep.subr.mxu0 0.0
    %1931 = vmatpush1.msra.mxu0 %v1857
    %1932 = vmatprep.subr.mxu0 0.0
    %1933 = vmatpush1.msra.mxu0 %v1858
    %1934 = vmatprep.subr.mxu0 0.0
    %1935 = vmatpush1.msra.mxu0 %v1859
    %1936 = vmatprep.subr.mxu0 0.0
    %1937 = vmatpush1.msra.mxu0 %v1860
    %1938 = vmatprep.subr.mxu0 0.0
    %1939 = vmatpush1.msra.mxu0 %v1861
    %1940 = vmatprep.subr.mxu0 0.0
    %1941 = vmatpush1.msra.mxu0 %v1862
    %1942 = vmatprep.subr.mxu0 0.0
    %1943 = vmatpush1.msra.mxu0 %v1863
    %1944 = vmatprep.subr.mxu0 0.0
    %1945 = vmatpush1.msra.mxu0 %v1864
    %1946 = vmatprep.subr.mxu0 0.0
    %1947 = vmatpush1.msra.mxu0 %v1865
    %1948 = vmatprep.subr.mxu0 0.0
    %1949 = vmatpush1.msra.mxu0 %v1866
    %1950 = vmatprep.subr.mxu0 0.0
    %1951 = vmatpush1.msra.mxu0 %v1867
    %1952 = vmatprep.subr.mxu0 0.0
    %1953 = vmatpush1.msra.mxu0 %v1868
    %1954 = vmatprep.subr.mxu0 0.0
    %1955 = vmatpush1.msra.mxu0 %v1869
    %1956 = vmatprep.subr.mxu0 0.0
    %1957 = vmatpush1.msra.mxu0 %v1870
    %1958 = vmatprep.subr.mxu0 0.0
    %1959 = vmatpush1.msra.mxu0 %v1871
    %1960 = vmatprep.subr.mxu0 0.0
    %1961 = vmatpush1.msra.mxu0 %v1872
    %1962 = vmatprep.subr.mxu0 0.0
    %1963 = vmatpush1.msra.mxu0 %v1873
    %1964 = vmatprep.subr.mxu0 0.0
    %1965 = vmatpush1.msra.mxu0 %v1874
    %1966 = vmatprep.subr.mxu0 0.0
    %1967 = vmatpush1.msra.mxu0 %v1875
    %1968 = vmatprep.subr.mxu0 0.0
    %1969 = vmatpush1.msra.mxu0 %v1876
    %1970 = vmatprep.subr.mxu0 0.0
    %1971 = vmatpush1.msra.mxu0 %v1877
    %1972 = vmatprep.subr.mxu0 0.0
    %1973 = vmatpush1.msra.mxu0 %v1878
    %1974 = vmatprep.subr.mxu0 0.0
    %1975 = vmatpush1.msra.mxu0 %v1879
    %1976 = vmatprep.mubr.f32.mxu0 %v1833
    %1977 = vmatmul.mubr.f32.gmra.mrb[0].mxu0 %v1832
    %v1978 = vpop.f32.mrb[0].mxu0
    %v1979 = vadd.f32 0.0, %v1978
    %v1980 = vpop.f32.mrb[0].mxu0
    %1981 = vmatprep.mubr.f32.mxu0 %v1837
    %1982 = vmatmul.mubr.f32.gmra.mrb[0].mxu0 %v1836
    %v1983 = vpop.f32.mrb[0].mxu0
    %v1984 = vadd.f32 0.0, %v1983
    %v1985 = vpop.f32.mrb[0].mxu0
    %1986 = vmatprep.mubr.f32.mxu0 %v1841
    %1987 = vmatmul.mubr.f32.gmra.mrb[0].mxu0 %v1840
    %v1988 = vpop.f32.mrb[0].mxu0
    %v1989 = vadd.f32 0.0, %v1988
    %v1990 = vpop.f32.mrb[0].mxu0
    %1991 = vmatprep.mubr.f32.mxu0 %v1845
    %1992 = vmatmul.mubr.f32.gmra.mrb[0].mxu0 %v1844
    %v1993 = vpop.f32.mrb[0].mxu0
    %v1994 = vadd.f32 0.0, %v1993
    %v1995 = vpop.f32.mrb[0].mxu0
    %1996 = vdwg.mxu0
    %1997 = vmatprep.subr.mxu0 0.0
    %1998 = vmatpush1.msra.mxu0 %v1880
    %1999 = vmatprep.subr.mxu0 0.0
    %2000 = vmatpush1.msra.mxu0 %v1881
    %2001 = vmatprep.subr.mxu0 0.0
    %2002 = vmatpush1.msra.mxu0 %v1882
    %2003 = vmatprep.subr.mxu0 0.0
    %2004 = vmatpush1.msra.mxu0 %v1883
    %2005 = vmatprep.subr.mxu0 0.0
    %2006 = vmatpush1.msra.mxu0 %v1884
    %2007 = vmatprep.subr.mxu0 0.0
    %2008 = vmatpush1.msra.mxu0 %v1885
    %2009 = vmatprep.subr.mxu0 0.0
    %2010 = vmatpush1.msra.mxu0 %v1886
    %2011 = vmatprep.subr.mxu0 0.0
    %2012 = vmatpush1.msra.mxu0 %v1887
    %2013 = vmatprep.subr.mxu0 0.0
    %2014 = vmatpush1.msra.mxu0 %v1888
    %2015 = vmatprep.subr.mxu0 0.0
    %2016 = vmatpush1.msra.mxu0 %v1889
    %2017 = vmatprep.subr.mxu0 0.0
    %2018 = vmatpush1.msra.mxu0 %v1890
    %2019 = vmatprep.subr.mxu0 0.0
    %2020 = vmatpush1.msra.mxu0 %v1891
    %2021 = vmatprep.subr.mxu0 0.0
    %2022 = vmatpush1.msra.mxu0 %v1892
    %2023 = vmatprep.subr.mxu0 0.0
    %2024 = vmatpush1.msra.mxu0 %v1893
    %2025 = vmatprep.subr.mxu0 0.0
    %2026 = vmatpush1.msra.mxu0 %v1894
    %2027 = vmatprep.subr.mxu0 0.0
    %2028 = vmatpush1.msra.mxu0 %v1895
    %2029 = vmatprep.subr.mxu0 0.0
    %2030 = vmatpush1.msra.mxu0 %v1896
    %2031 = vmatprep.subr.mxu0 0.0
    %2032 = vmatpush1.msra.mxu0 %v1897
    %2033 = vmatprep.subr.mxu0 0.0
    %2034 = vmatpush1.msra.mxu0 %v1898
    %2035 = vmatprep.subr.mxu0 0.0
    %2036 = vmatpush1.msra.mxu0 %v1899
    %2037 = vmatprep.subr.mxu0 0.0
    %2038 = vmatpush1.msra.mxu0 %v1900
    %2039 = vmatprep.subr.mxu0 0.0
    %2040 = vmatpush1.msra.mxu0 %v1901
    %2041 = vmatprep.subr.mxu0 0.0
    %2042 = vmatpush1.msra.mxu0 %v1902
    %2043 = vmatprep.subr.mxu0 0.0
    %2044 = vmatpush1.msra.mxu0 %v1903
    %2045 = vmatprep.subr.mxu0 0.0
    %2046 = vmatpush1.msra.mxu0 %v1904
    %2047 = vmatprep.subr.mxu0 0.0
    %2048 = vmatpush1.msra.mxu0 %v1905
    %2049 = vmatprep.subr.mxu0 0.0
    %2050 = vmatpush1.msra.mxu0 %v1906
    %2051 = vmatprep.subr.mxu0 0.0
    %2052 = vmatpush1.msra.mxu0 %v1907
    %2053 = vmatprep.subr.mxu0 0.0
    %2054 = vmatpush1.msra.mxu0 %v1908
    %2055 = vmatprep.subr.mxu0 0.0
    %2056 = vmatpush1.msra.mxu0 %v1909
    %2057 = vmatprep.subr.mxu0 0.0
    %2058 = vmatpush1.msra.mxu0 %v1910
    %2059 = vmatprep.subr.mxu0 0.0
    %2060 = vmatpush1.msra.mxu0 %v1911
    %2061 = vmatprep.mubr.f32.mxu0 %v1835
    %2062 = vmatmul.mubr.f32.gmra.mrb[0].mxu0 %v1834
    %v2063 = vpop.f32.mrb[0].mxu0
    %v2064 = vadd.f32 %v1979, %v2063
    %v2065 = vpop.f32.mrb[0].mxu0
    %2066 = vmatprep.mubr.f32.mxu0 %v1839
    %2067 = vmatmul.mubr.f32.gmra.mrb[0].mxu0 %v1838
    %v2068 = vpop.f32.mrb[0].mxu0
    %v2069 = vadd.f32 %v1984, %v2068
    %v2070 = vpop.f32.mrb[0].mxu0
    %2071 = vmatprep.mubr.f32.mxu0 %v1843
    %2072 = vmatmul.mubr.f32.gmra.mrb[0].mxu0 %v1842
    %v2073 = vpop.f32.mrb[0].mxu0
    %v2074 = vadd.f32 %v1989, %v2073
    %v2075 = vpop.f32.mrb[0].mxu0
    %2076 = vmatprep.mubr.f32.mxu0 %v1847
    %2077 = vmatmul.mubr.f32.gmra.mrb[0].mxu0 %v1846
    %v2078 = vpop.f32.mrb[0].mxu0
    %v2079 = vadd.f32 %v1994, %v2078
    %v2080 = vpop.f32.mrb[0].mxu0
    %2081 = vdwg.mxu0
    %v2082 = vld [vmem:[%s6] sm:$0xff]
    %v2083 = vld [vmem:[%s6 + $0x8] sm:$0xff]
    %v2084 = vld [vmem:[%s6 + $0x10] sm:$0xff]
    %v2085 = vld [vmem:[%s6 + $0x18] sm:$0xff]
    %v2086 = vld [vmem:[%s7] sm:$0xff]
    %v2087 = vld [vmem:[%s7 + $0x8] sm:$0xff]
    %v2088 = vld [vmem:[%s7 + $0x10] sm:$0xff]
    %v2089 = vld [vmem:[%s7 + $0x18] sm:$0xff]
    %2091 = vset.pattern.permute.xlu0 0
    %2092 = vperm.xlu0 %2091, %v2086
    %v2093 = vpop.permute.xlu0 %2092
    %2096 = vset.pattern.permute.xlu0 0
    %2097 = vperm.xlu0 %2096, %v2087
    %v2098 = vpop.permute.xlu0 %2097
    %2101 = vset.pattern.permute.xlu0 0
    %2102 = vperm.xlu0 %2101, %v2088
    %v2103 = vpop.permute.xlu0 %2102
    %2106 = vset.pattern.permute.xlu0 0
    %2107 = vperm.xlu0 %2106, %v2089
    %v2108 = vpop.permute.xlu0 %2107
    %vm2110 = vcmask 261120
    %v2112 = vsel %vm2110, %v2082, 0
    %v2115 = vsel %vm2110, %v2083, 0
    %v2118 = vsel %vm2110, %v2084, 0
    %v2121 = vsel %vm2110, %v2085, 0
    %2123 = vmatprep.subr.mxu0 0.0
    %2124 = vmatpush1.msra.mxu0 %v2064
    %2125 = vmatprep.subr.mxu0 0.0
    %2126 = vmatpush1.msra.mxu0 %v2069
    %2127 = vmatprep.subr.mxu0 0.0
    %2128 = vmatpush1.msra.mxu0 %v2074
    %2129 = vmatprep.subr.mxu0 0.0
    %2130 = vmatpush1.msra.mxu0 %v2079
    %2131 = vmatprep.subr.mxu0 0.0
    %2132 = vmatpush1.msra.mxu0 0.0
    %2133 = vmatprep.subr.mxu0 0.0
    %2134 = vmatpush1.msra.mxu0 0.0
    %2135 = vmatprep.subr.mxu0 0.0
    %2136 = vmatpush1.msra.mxu0 0.0
    %2137 = vmatprep.subr.mxu0 0.0
    %2138 = vmatpush1.msra.mxu0 0.0
    %2139 = vmatprep.subr.mxu0 0.0
    %2140 = vmatpush1.msra.mxu0 0.0
    %2141 = vmatprep.subr.mxu0 0.0
    %2142 = vmatpush1.msra.mxu0 0.0
    %2143 = vmatprep.subr.mxu0 0.0
    %2144 = vmatpush1.msra.mxu0 0.0
    %2145 = vmatprep.subr.mxu0 0.0
    %2146 = vmatpush1.msra.mxu0 0.0
    %2147 = vmatprep.subr.mxu0 0.0
    %2148 = vmatpush1.msra.mxu0 0.0
    %2149 = vmatprep.subr.mxu0 0.0
    %2150 = vmatpush1.msra.mxu0 0.0
    %2151 = vmatprep.subr.mxu0 0.0
    %2152 = vmatpush1.msra.mxu0 0.0
    %2153 = vmatprep.subr.mxu0 0.0
    %2154 = vmatpush1.msra.mxu0 0.0
    %2155 = vmatprep.subr.mxu0 0.0
    %2156 = vmatpush1.msra.mxu0 0.0
    %2157 = vmatprep.subr.mxu0 0.0
    %2158 = vmatpush1.msra.mxu0 0.0
    %2159 = vmatprep.subr.mxu0 0.0
    %2160 = vmatpush1.msra.mxu0 0.0
    %2161 = vmatprep.subr.mxu0 0.0
    %2162 = vmatpush1.msra.mxu0 0.0
    %2163 = vmatprep.subr.mxu0 0.0
    %2164 = vmatpush1.msra.mxu0 0.0
    %2165 = vmatprep.subr.mxu0 0.0
    %2166 = vmatpush1.msra.mxu0 0.0
    %2167 = vmatprep.subr.mxu0 0.0
    %2168 = vmatpush1.msra.mxu0 0.0
    %2169 = vmatprep.subr.mxu0 0.0
    %2170 = vmatpush1.msra.mxu0 0.0
    %2171 = vmatprep.subr.mxu0 0.0
    %2172 = vmatpush1.msra.mxu0 0.0
    %2173 = vmatprep.subr.mxu0 0.0
    %2174 = vmatpush1.msra.mxu0 0.0
    %2175 = vmatprep.subr.mxu0 0.0
    %2176 = vmatpush1.msra.mxu0 0.0
    %2177 = vmatprep.subr.mxu0 0.0
    %2178 = vmatpush1.msra.mxu0 0.0
    %2179 = vmatprep.subr.mxu0 0.0
    %2180 = vmatpush1.msra.mxu0 0.0
    %2181 = vmatprep.subr.mxu0 0.0
    %2182 = vmatpush1.msra.mxu0 0.0
    %2183 = vmatprep.subr.mxu0 0.0
    %2184 = vmatpush1.msra.mxu0 0.0
    %2185 = vmatprep.subr.mxu0 0.0
    %2186 = vmatpush1.msra.mxu0 0.0
    %2187 = vmatprep.mubr.f32.mxu0 0.0
    %2188 = vmatmul.mubr.f32.gmra.mrb[0].mxu0 %v2112
    %v2189 = vpop.f32.mrb[0].mxu0
    %v2190 = vadd.f32 %v2093, %v2189
    %v2191 = vpop.f32.mrb[0].mxu0
    %2192 = vmatprep.mubr.f32.mxu0 0.0
    %2193 = vmatmul.mubr.f32.gmra.mrb[0].mxu0 %v2115
    %v2194 = vpop.f32.mrb[0].mxu0
    %v2195 = vadd.f32 %v2098, %v2194
    %v2196 = vpop.f32.mrb[0].mxu0
    %2197 = vmatprep.mubr.f32.mxu0 0.0
    %2198 = vmatmul.mubr.f32.gmra.mrb[0].mxu0 %v2118
    %v2199 = vpop.f32.mrb[0].mxu0
    %v2200 = vadd.f32 %v2103, %v2199
    %v2201 = vpop.f32.mrb[0].mxu0
    %2202 = vmatprep.mubr.f32.mxu0 0.0
    %2203 = vmatmul.mubr.f32.gmra.mrb[0].mxu0 %v2121
    %v2204 = vpop.f32.mrb[0].mxu0
    %v2205 = vadd.f32 %v2108, %v2204
    %v2206 = vpop.f32.mrb[0].mxu0
    %2207 = vdwg.mxu0
    %v2208 = vld [vmem:[%s8] sm:$0x7]
    %v2209 = vld [vmem:[%s9] sm:$0x7]
    %2211 = vset.pattern.permute.xlu0 0
    %2212 = vperm.xlu0 %2211, %v2209
    %v2213 = vpop.permute.xlu0 %2212
    %v2216 = vsel %vm2110, %v2208, 0
    %2218 = vmatprep.subr.mxu0 0.0
    %2219 = vmatpush1.msra.mxu0 %v2190
    %2220 = vmatprep.subr.mxu0 0.0
    %2221 = vmatpush1.msra.mxu0 %v2195
    %2222 = vmatprep.subr.mxu0 0.0
    %2223 = vmatpush1.msra.mxu0 %v2200
    %2224 = vmatprep.subr.mxu0 0.0
    %2225 = vmatpush1.msra.mxu0 %v2205
    %2226 = vmatprep.subr.mxu0 0.0
    %2227 = vmatpush1.msra.mxu0 0.0
    %2228 = vmatprep.subr.mxu0 0.0
    %2229 = vmatpush1.msra.mxu0 0.0
    %2230 = vmatprep.subr.mxu0 0.0
    %2231 = vmatpush1.msra.mxu0 0.0
    %2232 = vmatprep.subr.mxu0 0.0
    %2233 = vmatpush1.msra.mxu0 0.0
    %2234 = vmatprep.subr.mxu0 0.0
    %2235 = vmatpush1.msra.mxu0 0.0
    %2236 = vmatprep.subr.mxu0 0.0
    %2237 = vmatpush1.msra.mxu0 0.0
    %2238 = vmatprep.subr.mxu0 0.0
    %2239 = vmatpush1.msra.mxu0 0.0
    %2240 = vmatprep.subr.mxu0 0.0
    %2241 = vmatpush1.msra.mxu0 0.0
    %2242 = vmatprep.subr.mxu0 0.0
    %2243 = vmatpush1.msra.mxu0 0.0
    %2244 = vmatprep.subr.mxu0 0.0
    %2245 = vmatpush1.msra.mxu0 0.0
    %2246 = vmatprep.subr.mxu0 0.0
    %2247 = vmatpush1.msra.mxu0 0.0
    %2248 = vmatprep.subr.mxu0 0.0
    %2249 = vmatpush1.msra.mxu0 0.0
    %2250 = vmatprep.subr.mxu0 0.0
    %2251 = vmatpush1.msra.mxu0 0.0
    %2252 = vmatprep.subr.mxu0 0.0
    %2253 = vmatpush1.msra.mxu0 0.0
    %2254 = vmatprep.subr.mxu0 0.0
    %2255 = vmatpush1.msra.mxu0 0.0
    %2256 = vmatprep.subr.mxu0 0.0
    %2257 = vmatpush1.msra.mxu0 0.0
    %2258 = vmatprep.subr.mxu0 0.0
    %2259 = vmatpush1.msra.mxu0 0.0
    %2260 = vmatprep.subr.mxu0 0.0
    %2261 = vmatpush1.msra.mxu0 0.0
    %2262 = vmatprep.subr.mxu0 0.0
    %2263 = vmatpush1.msra.mxu0 0.0
    %2264 = vmatprep.subr.mxu0 0.0
    %2265 = vmatpush1.msra.mxu0 0.0
    %2266 = vmatprep.subr.mxu0 0.0
    %2267 = vmatpush1.msra.mxu0 0.0
    %2268 = vmatprep.subr.mxu0 0.0
    %2269 = vmatpush1.msra.mxu0 0.0
    %2270 = vmatprep.subr.mxu0 0.0
    %2271 = vmatpush1.msra.mxu0 0.0
    %2272 = vmatprep.subr.mxu0 0.0
    %2273 = vmatpush1.msra.mxu0 0.0
    %2274 = vmatprep.subr.mxu0 0.0
    %2275 = vmatpush1.msra.mxu0 0.0
    %2276 = vmatprep.subr.mxu0 0.0
    %2277 = vmatpush1.msra.mxu0 0.0
    %2278 = vmatprep.subr.mxu0 0.0
    %2279 = vmatpush1.msra.mxu0 0.0
    %2280 = vmatprep.subr.mxu0 0.0
    %2281 = vmatpush1.msra.mxu0 0.0
    %2282 = vmatprep.mubr.f32.mxu0 0.0
    %2283 = vmatmul.mubr.f32.gmra.mrb[0].mxu0 %v2216
    %v2284 = vpop.f32.mrb[0].mxu0
    %v2285 = vadd.f32 %v2213, %v2284
    %v2286 = vpop.f32.mrb[0].mxu0
    %2287 = vdwg.mxu0
    %vm2288 = vcmask 10240
    %v2289 = vsel %vm2288, %v2285, -inf
    %v2290 = vrot.slane %v2289, 4
    %v2291 = vmax.f32 %v2289, %v2290
    %v2292 = vrot.slane %v2291, 2
    %v2293 = vmax.f32 %v2291, %v2292
    %v2294 = vrot.slane %v2293, 1
    %v2295 = vmax.f32 %v2293, %v2294
    %v2296 = vsub.f32 %v2285, %v2295
    %v2297 = vmul.f32 %v2296, 1.442695
    %v2298 = vpow.pop %v2297
    %v2299 = vsel %vm2288, %v2298, 0.0
    %v2300 = vrot.slane %v2299, 4
    %v2301 = vadd.f32 %v2299, %v2300
    %v2302 = vrot.slane %v2301, 2
    %v2303 = vadd.f32 %v2301, %v2302
    %v2304 = vrot.slane %v2303, 1
    %v2305 = vadd.f32 %v2303, %v2304
    %v2306 = vrcp.pop %v2305
    %v2307 = vmul.f32 %v2298, %v2306
    %2308 = vst.msk [vmem:[%s12] sm:$0x7] %vm2288, %v2307
    %v2309 = vlaneseq
    %v2310 = vshrl.u32 %v2309, 7
    %v2311 = vld [vmem:[%s10] sm:$0x1]
    %v2312 = vlaneseq
    %v2313 = vshrl.u32 %v2312, 7
    %v2314 = vsub.s32 0, %v2313
    %v2315 = vrot.slane %v2311, %v2314
    %vm2316 = vcmp.eq.s32.totalorder %v2310, %v2315
    %v2317 = vsel %vm2316, 1, 0
    %v2318 = vcvt.s32.f32 %v2317
    %v2319 = vlog2.pop %v2305
    %v2320 = vmul.f32 %v2319, 0.6931472
    %v2321 = vsub.f32 %v2296, %v2320
    %v2322 = vld [vmem:[%s11] sm:$0x7]
    %2324 = vset.pattern.permute.xlu0 0
    %2325 = vperm.xlu0 %2324, %v2322
    %v2326 = vpop.permute.xlu0 %2325
    %v2328 = vmul.f32 %v2318, %v2326
    %v2329 = vsel %vm2288, %v2328, 0.0
    %v2330 = vrot.slane %v2329, 4
    %v2331 = vadd.f32 %v2329, %v2330
    %v2332 = vrot.slane %v2331, 2
    %v2333 = vadd.f32 %v2331, %v2332
    %v2334 = vrot.slane %v2333, 1
    %v2335 = vadd.f32 %v2333, %v2334
    %v2336 = vmul.f32 %v2318, %v2321
    %v2337 = vsel %vm2288, %v2336, 0.0
    %v2338 = vrot.slane %v2337, 4
    %v2339 = vadd.f32 %v2337, %v2338
    %v2340 = vrot.slane %v2339, 2
    %v2341 = vadd.f32 %v2339, %v2340
    %v2342 = vrot.slane %v2341, 1
    %v2343 = vadd.f32 %v2341, %v2342
    %v2344 = vsub.f32 0.0, %v2343
    %v2345 = vmul.f32 %v2335, %v2344
    %vm2346 = vcmask 15360
    %v2347 = vsel %vm2346, %v2345, 0.0
    %2348 = vadd.xlane.f32.xlu0 %v2347
    %v2349 = vpop.xlane.xlu0 %2348
    %v2350 = vsel %vm2346, %v2335, 0.0
    %2351 = vadd.xlane.f32.xlu0 %v2350
    %v2352 = vpop.xlane.xlu0 %2351
    %v2353 = vrcp.pop %v2352
    %v2354 = vmul.f32 %v2349, %v2353
    %vm2355 = vcmask 0
    %2356 = vst.msk [vmem:[#allocation2] sm:$0x1] %vm2355, %v2354
    // Predicated region
    $region50: #{pm_tb_clsnet_forward.1} parent=1 // pred_check
      _
    $region51: #{pm_tb_clsnet_forward.1} parent=1 // pred_check_branch
      %2358 = sbr.rel (0) target = $region53
    $region52: #{pm_tb_clsnet_forward.1} parent=1 // pred_region
      _
    $region53: #{pm_tb_clsnet_forward.1} parent=1 // pred_fallthru
      _
    // Predicated region
    $region54: #{pm_tb_clsnet_forward.1} parent=1 // pred_check
      _
    $region55: #{pm_tb_clsnet_forward.1} parent=1 // pred_check_branch
      %2360 = sbr.rel (0) target = $region57
    $region56: #{pm_tb_clsnet_forward.1} parent=1 // pred_region
      %s2362 = ssub.s32 16, 16
      %2363 = vsyncadd [#allocation3], %s2362
      %s2365 = sshll.u32 [#allocation2], 4
      %s2366 = int_to_ptr.vmem [resolvable:$true] %s2365
      %2368 = dma.vmem_to_hbm [thread:$0]  %s2366, 16, %s13, [#allocation3]
    $region57: #{pm_tb_clsnet_forward.1} parent=1 // pred_fallthru
      _
    // Predicated region
    $region58: #{pm_tb_clsnet_forward.1} parent=1 // pred_check
      _
    $region59: #{pm_tb_clsnet_forward.1} parent=1 // pred_check_branch
      %2370 = sbr.rel (0) target = $region61
    $region60: #{pm_tb_clsnet_forward.1} parent=1 // pred_region
      _
    $region61: #{pm_tb_clsnet_forward.1} parent=1 // pred_fallthru
      _
    // Predicated region
    $region62: #{pm_tb_clsnet_forward.1} parent=1 // pred_check
      _
    $region63: #{pm_tb_clsnet_forward.1} parent=1 // pred_check_branch
      %2372 = sbr.rel (0) target = $region65
    $region64: #{pm_tb_clsnet_forward.1} parent=1 // pred_region
      %2373 = dma.done [#allocation3], 16
    $region65: #{pm_tb_clsnet_forward.1} parent=1 // pred_fallthru
      _
    %2374 = vsyncpa [#allocation3], 1

</llo_original>
